<compile_context>
chip_gen: v6e
topology: v6e:2x2x1
jax: 0.10.0
libtpu: 0.0.40
codegen_flags: <defaults>
</compile_context>

<pallas_src>
import functools

import jax
import jax.numpy as jnp
from jax import lax
from jax.experimental import pallas as pl
from jax.experimental.pallas import tpu as pltpu

EPS = 1e-5


def _hswish(x):
    return x * jnp.clip(x + 3.0, 0.0, 6.0) * (1.0 / 6.0)


def _relu(x):
    return jnp.maximum(x, 0.0)


def _bn_folded(t, gamma, beta, fold, unfold, count, act=None):
    """Fused training-mode BatchNorm on a lane-folded (rows, W*C) slab.

    Single-pass per-channel stats.  The (sum, sum-of-squares) fold and the
    (scale, bias) unfold are each one small stacked matmul.
    """
    s1 = jnp.sum(t, axis=0, keepdims=True)
    s2 = jnp.sum(t * t, axis=0, keepdims=True)
    stats = jnp.dot(jnp.concatenate([s1, s2], axis=0), fold,
                    preferred_element_type=jnp.float32)               # (2, C)
    inv_n = 1.0 / float(count)
    mean = stats[0:1, :] * inv_n
    var = stats[1:2, :] * inv_n - mean * mean                         # biased variance
    # TODO(synk): single-pass E[x^2]-E[x]^2 can cancel for large-mean activations;
    # the production tiled pipeline should use a two-pass (stats, then apply) BN.
    scale_c = gamma * lax.rsqrt(var + EPS)                            # (1, C)
    bias_c = beta - mean * scale_c                                    # (1, C)
    sb = jnp.dot(jnp.concatenate([scale_c, bias_c], axis=0), unfold,
                 preferred_element_type=jnp.float32)                  # (2, W*C)
    y = t * sb[0:1, :] + sb[1:2, :]
    return act(y) if act is not None else y


def mbconv_kernel(x_ref, wexp_ref, g1_ref, b1_ref,
                  wdw_ref, g2_ref, b2_ref,
                  sw1_ref, sb1_ref, sw2_ref, sb2_ref,
                  wproj_ref, g3_ref, b3_ref,
                  ff1_ref, fu1_ref, ff2_ref, fu2_ref, ffo_ref, fuo_ref,
                  o_ref,
                  *, N, H, W, K, S, Cexp, Hout, Wout,
                  act, use_se, use_res, use_expand):
    P = K // 2

    # ---- 1x1 expansion conv + BN + act (block-diagonal bf16 MXU matmul) ----
    if use_expand:
        t = jnp.dot(x_ref[...].astype(jnp.bfloat16), wexp_ref[...],
                    preferred_element_type=jnp.float32)       # (N*H, W*Cexp)
        t = _bn_folded(t, g1_ref[...], b1_ref[...], ff1_ref[...], fu1_ref[...],
                       count=N * H * W, act=act)
    else:
        t = x_ref[...]

    # ---- depthwise KxK conv --------------------------------------------------
    # Horizontal (w / lane) halo masks are pre-folded into the weights (zeroed
    # lanes), so the inner loop is only lane-roll + MAC.  The sublane roll and
    # row mask for the h direction are hoisted out of the kw loop.
    R, L = N * H, W * Cexp
    row_h = lax.broadcasted_iota(jnp.int32, (R, 1), 0) % H    # image row per slab row
    wdw = wdw_ref[...]                                        # (K*K, W*Cexp) f32
    acc = jnp.zeros((R, L), jnp.float32)
    for kh in range(K):
        dh = kh - P
        t_h = t if dh == 0 else pltpu.roll(t, shift=(-dh) % R, axis=0)
        if dh < 0:
            t_h = jnp.where(row_h >= -dh, t_h, 0.0)
        elif dh > 0:
            t_h = jnp.where(row_h < H - dh, t_h, 0.0)
        for kw in range(K):
            dw = kw - P
            shifted = t_h if dw == 0 else pltpu.roll(
                t_h, shift=(-dw * Cexp) % L, axis=1)
            tap = kh * K + kw
            acc = acc + shifted * wdw[tap:tap + 1, :]

    if S > 1:
        # TODO(synk): stride>1 takes a value-level strided selection (relayout);
        # only S == 1 (and odd K) is the optimized lane-dense path.
        acc = acc.reshape(N, H, W, Cexp)[:, ::S, ::S, :].reshape(
            N * Hout, Wout * Cexp)

    t = _bn_folded(acc, g2_ref[...], b2_ref[...], ff2_ref[...], fu2_ref[...],
                   count=N * Hout * Wout, act=act)            # (N*Hout, Wout*Cexp)

    # ---- squeeze-and-excite -------------------------------------------------
    if use_se:
        t3 = t.reshape(N, Hout, Wout * Cexp)
        pooled = jnp.dot(jnp.sum(t3, axis=1), ff2_ref[...],
                         preferred_element_type=jnp.float32) * (1.0 / (Hout * Wout))
        s = jnp.maximum(jnp.dot(pooled, sw1_ref[...],
                                preferred_element_type=jnp.float32) + sb1_ref[...],
                        0.0)
        s = jax.nn.sigmoid(jnp.dot(s, sw2_ref[...],
                                   preferred_element_type=jnp.float32) + sb2_ref[...])
        s_lane = jnp.dot(s, fu2_ref[...],
                         preferred_element_type=jnp.float32)  # (N, Wout*Cexp)
        t = (t3 * s_lane[:, None, :]).reshape(N * Hout, Wout * Cexp)

    # ---- 1x1 projection conv + BN (+ residual) ------------------------------
    y = jnp.dot(t.astype(jnp.bfloat16), wproj_ref[...],
                preferred_element_type=jnp.float32)           # (N*Hout, Wout*Cout)
    y = _bn_folded(y, g3_ref[...], b3_ref[...], ffo_ref[...], fuo_ref[...],
                   count=N * Hout * Wout, act=None)
    if use_res:
        # Re-read the input here instead of pinning it across the whole body.
        y = y + x_ref[...]
    o_ref[...] = y.astype(o_ref.dtype)


def _full_spec(shape):
    nd = len(shape)
    return pl.BlockSpec(shape, lambda i, _nd=nd: (0,) * _nd)


def _block_diag(w, reps):
    """(Cin, Cout) -> (reps*Cin, reps*Cout) block-diagonal: per-pixel 1x1 conv as
    one lane-dense matmul in the folded (rows, W*C) layout."""
    cin, cout = w.shape
    eye = jnp.eye(reps, dtype=w.dtype)
    return (eye[:, None, :, None] * w[None, :, None, :]).reshape(
        reps * cin, reps * cout)


def _fold_mat(reps, c):
    """(reps*C, C): sums the `reps` spatial copies of each channel (lane -> channel)."""
    return jnp.tile(jnp.eye(c, dtype=jnp.float32), (reps, 1))


def _dw_weights_lane_masked(w_dw, *, K, W, C):
    """(K*K, C) depthwise taps -> (K*K, W*C) lane-tiled taps with the horizontal
    halo masks folded in (out-of-image lanes zeroed), so the kernel hot loop needs
    no per-tap lane masking."""
    P = K // 2
    w = jnp.tile(w_dw.astype(jnp.float32), (1, W))            # (K*K, W*C)
    w_out = (jnp.arange(W * C) // C)[None, :]                 # output w index per lane
    rows = []
    for kh in range(K):
        for kw in range(K):
            dw = kw - P
            row = w[kh * K + kw:kh * K + kw + 1, :]
            if dw < 0:
                row = jnp.where(w_out >= -dw, row, 0.0)
            elif dw > 0:
                row = jnp.where(w_out < W - dw, row, 0.0)
            rows.append(row)
    return jnp.concatenate(rows, axis=0)


def prepare_mbconv_params(params, *, in_channels, out_channels, kernel_size,
                          stride, exp_channels, H, W):
    """One-time (parameter-load-time) weight transforms for the fused kernel."""
    K, S = kernel_size, stride
    P = K // 2
    Wout = (W + 2 * P - K) // S + 1
    Cexp, Cout = exp_channels, out_channels

    # 1x1 convs as block-diagonal lane-dense matmuls; bf16 weights halve DMA bytes.
    # TODO(synk): for production W / channel counts cap the block-diag fold factor
    # (reps ~= ceil(128 / C)) or drop block-diag once C >= 128 -- full-W fold makes
    # the weight scale as W^2*Cin*Cexp, which would blow v7x's 64 MiB VMEM.
    wexp_bd = _block_diag(params['w_exp'], W).astype(jnp.bfloat16)
    wproj_bd = _block_diag(params['w_proj'], Wout).astype(jnp.bfloat16)

    wdw_masked = _dw_weights_lane_masked(params['w_dw'], K=K, W=W, C=Cexp)

    ff1, ff2, ffo = _fold_mat(W, Cexp), _fold_mat(Wout, Cexp), _fold_mat(Wout, Cout)
    prepped = dict(params)
    prepped.update(wexp_bd=wexp_bd, wproj_bd=wproj_bd, wdw_masked=wdw_masked,
                   ff1=ff1, fu1=ff1.T, ff2=ff2, fu2=ff2.T, ffo=ffo, fuo=ffo.T)
    return prepped


def mbconv_pallas_nhwc(x_nhwc, prepped, *, in_channels, out_channels, kernel_size,
                       stride, exp_channels, se, nl):
    """Core NHWC entry point (no layout transposes around the kernel)."""
    N, H, W, Cin = x_nhwc.shape
    assert Cin == in_channels
    K, S = kernel_size, stride
    P = K // 2
    Hout = (H + 2 * P - K) // S + 1
    Wout = (W + 2 * P - K) // S + 1
    Cexp, Cout = exp_channels, out_channels
    act = _relu if nl == 'RE' else _hswish
    use_expand = exp_channels != in_channels
    if not use_expand:
        assert Cexp == Cin, "no-expand path requires exp_channels == in_channels"
    use_res = (S == 1 and in_channels == out_channels)

    # NHWC -> lane-dense folded (N*H, W*Cin): W*channels on the lane axis.
    x_f = x_nhwc.astype(jnp.float32).reshape(N * H, W * Cin)

    kernel = functools.partial(
        mbconv_kernel, N=N, H=H, W=W, K=K, S=S, Cexp=Cexp, Hout=Hout, Wout=Wout,
        act=act, use_se=se, use_res=use_res, use_expand=use_expand)

    ins = (x_f, prepped['wexp_bd'], prepped['g1'], prepped['b1'],
           prepped['wdw_masked'], prepped['g2'], prepped['b2'],
           prepped['sw1'], prepped['sb1'], prepped['sw2'], prepped['sb2'],
           prepped['wproj_bd'], prepped['g3'], prepped['b3'],
           prepped['ff1'], prepped['fu1'], prepped['ff2'], prepped['fu2'],
           prepped['ffo'], prepped['fuo'])

    out_rows, out_lanes = N * Hout, Wout * Cout
    # vmem limit derived from actual buffer sizes (+ headroom), clamped so it is
    # valid across v5e/v6e (128 MiB physical) and v7x (64 MiB physical).
    in_bytes = sum(int(a.size) * a.dtype.itemsize for a in ins)
    out_bytes = out_rows * out_lanes * 4
    slab_bytes = N * H * W * Cexp * 4
    vmem_limit = int(min(max((2 * (in_bytes + out_bytes) + 10 * slab_bytes) * 1.3,
                             16 << 20), 60 << 20))

    out = pl.pallas_call(
        kernel,
        out_shape=jax.ShapeDtypeStruct((out_rows, out_lanes), jnp.float32),
        grid=(1,),
        in_specs=[_full_spec(a.shape) for a in ins],
        out_specs=_full_spec((out_rows, out_lanes)),
        compiler_params=pltpu.CompilerParams(
            dimension_semantics=("arbitrary",),
            vmem_limit_bytes=vmem_limit),
    )(*ins)

    return out.reshape(N, Hout, Wout, Cout)


def mbconv_pallas(x_nchw, prepped, **cfg):
    """NCHW adapter kept only for parity with the PyTorch module interface.
    TODO(synk): in a full NHWC model drop these two transposes (extra HBM round
    trips around a memory-bound block)."""
    x_nhwc = jnp.transpose(x_nchw, (0, 2, 3, 1))
    y = mbconv_pallas_nhwc(x_nhwc, prepped, **cfg)
    return jnp.transpose(y, (0, 3, 1, 2))


def mbconv_reference(x_nchw, params, *, in_channels, out_channels, kernel_size,
                     stride, exp_channels, se, nl):
    """Pure-JAX reference (uses lax.conv for the depthwise path)."""
    x = jnp.transpose(x_nchw, (0, 2, 3, 1)).astype(jnp.float32)
    act = _relu if nl == 'RE' else _hswish

    def bn4(t, g, b):
        mean = jnp.mean(t, axis=(0, 1, 2), keepdims=True)
        var = jnp.mean(jnp.square(t - mean), axis=(0, 1, 2), keepdims=True)
        return (t - mean) * lax.rsqrt(var + EPS) * g.reshape(1, 1, 1, -1) \
            + b.reshape(1, 1, 1, -1)

    t = x
    if exp_channels != in_channels:
        t = jnp.einsum('nhwc,cd->nhwd', t, params['w_exp'])
        t = act(bn4(t, params['g1'], params['b1']))
    K, P = kernel_size, kernel_size // 2
    wdw = params['w_dw'].reshape(K, K, 1, exp_channels)           # HWIO, I=1
    t = lax.conv_general_dilated(
        t, wdw, (stride, stride), [(P, P), (P, P)],
        dimension_numbers=('NHWC', 'HWIO', 'NHWC'),
        feature_group_count=exp_channels)
    t = act(bn4(t, params['g2'], params['b2']))
    if se:
        s = jnp.mean(t, axis=(1, 2))
        s = jnp.maximum(s @ params['sw1'] + params['sb1'], 0.0)
        s = jax.nn.sigmoid(s @ params['sw2'] + params['sb2'])
        t = t * s[:, None, None, :]
    y = jnp.einsum('nhwc,cd->nhwd', t, params['w_proj'])
    y = bn4(y, params['g3'], params['b3'])
    if stride == 1 and in_channels == out_channels:
        y = y + x
    return jnp.transpose(y, (0, 3, 1, 2))


def make_params(key, *, in_channels, out_channels, kernel_size, exp_channels,
                se_ratio=0.25):
    """Deterministic synthetic parameters, already in kernel-friendly layout."""
    K = kernel_size
    Cred = max(1, int(exp_channels * se_ratio))
    ks = jax.random.split(key, 12)
    n = lambda k, s, scale=0.1: scale * jax.random.normal(k, s, jnp.float32)
    return {
        # PyTorch Conv2d(in,exp,1) weight (exp,in,1,1) -> stored transposed (in,exp)
        'w_exp': n(ks[0], (in_channels, exp_channels)),
        'g1': 1.0 + n(ks[1], (1, exp_channels)),
        'b1': n(ks[2], (1, exp_channels)),
        # depthwise weight (exp,1,K,K) -> (K*K, exp) with row = kh*K + kw
        'w_dw': n(ks[3], (K * K, exp_channels)),
        'g2': 1.0 + n(ks[4], (1, exp_channels)),
        'b2': n(ks[5], (1, exp_channels)),
        # SE fc1 / fc2 (1x1 convs with bias), stored transposed for matmul
        'sw1': n(ks[6], (exp_channels, Cred)),
        'sb1': n(ks[7], (1, Cred)),
        'sw2': n(ks[8], (Cred, exp_channels)),
        'sb2': n(ks[9], (1, exp_channels)),
        # projection Conv2d(exp,out,1) -> (exp,out)
        'w_proj': n(ks[10], (exp_channels, out_channels)),
        'g3': 1.0 + n(ks[11], (1, out_channels)),
        'b3': jnp.zeros((1, out_channels), jnp.float32),
    }


if __name__ == "__main__":
    cfg = dict(in_channels=8, out_channels=8, kernel_size=3, stride=1,
               exp_channels=16, se=True, nl='HS')

    key = jax.random.PRNGKey(0)
    kx, kp = jax.random.split(key)
    # PyTorch-convention input: NCHW
    N, Hs, Ws = 2, 16, 16
    x = jax.random.normal(kx, (N, cfg['in_channels'], Hs, Ws), jnp.float32)
    params = make_params(kp, in_channels=cfg['in_channels'],
                         out_channels=cfg['out_channels'],
                         kernel_size=cfg['kernel_size'],
                         exp_channels=cfg['exp_channels'])
    # One-time weight preprocessing (parameter-load time, not per forward call).
    prepped = prepare_mbconv_params(
        params, in_channels=cfg['in_channels'], out_channels=cfg['out_channels'],
        kernel_size=cfg['kernel_size'], stride=cfg['stride'],
        exp_channels=cfg['exp_channels'], H=Hs, W=Ws)

    y = jax.block_until_ready(mbconv_pallas(x, prepped, **cfg))
    y_ref = jax.block_until_ready(mbconv_reference(x, params, **cfg))

    assert y.shape == (N, cfg['out_channels'], Hs, Ws), y.shape
    err = float(jnp.max(jnp.abs(y - y_ref)))
    # bf16 matmul operands (f32 accumulation) => slightly looser tolerance
    assert jnp.allclose(y, y_ref, rtol=2e-2, atol=2e-2), err

    print("KERNEL_OK")
</pallas_src>

<mosaic_0001>
module attributes {stable_mosaic.version = 11 : i64} {
  func.func @mbconv_kernel(%arg0: i32, %arg1: memref<32x128xf32, #tpu.memory_space<vmem>>, %arg2: memref<128x256xbf16, #tpu.memory_space<vmem>>, %arg3: memref<1x16xf32, #tpu.memory_space<vmem>>, %arg4: memref<1x16xf32, #tpu.memory_space<vmem>>, %arg5: memref<9x256xf32, #tpu.memory_space<vmem>>, %arg6: memref<1x16xf32, #tpu.memory_space<vmem>>, %arg7: memref<1x16xf32, #tpu.memory_space<vmem>>, %arg8: memref<16x4xf32, #tpu.memory_space<vmem>>, %arg9: memref<1x4xf32, #tpu.memory_space<vmem>>, %arg10: memref<4x16xf32, #tpu.memory_space<vmem>>, %arg11: memref<1x16xf32, #tpu.memory_space<vmem>>, %arg12: memref<256x128xbf16, #tpu.memory_space<vmem>>, %arg13: memref<1x8xf32, #tpu.memory_space<vmem>>, %arg14: memref<1x8xf32, #tpu.memory_space<vmem>>, %arg15: memref<256x16xf32, #tpu.memory_space<vmem>>, %arg16: memref<16x256xf32, #tpu.memory_space<vmem>>, %arg17: memref<256x16xf32, #tpu.memory_space<vmem>>, %arg18: memref<16x256xf32, #tpu.memory_space<vmem>>, %arg19: memref<128x8xf32, #tpu.memory_space<vmem>>, %arg20: memref<8x128xf32, #tpu.memory_space<vmem>>, %arg21: memref<32x128xf32, #tpu.memory_space<vmem>>) attributes {dimension_semantics = [#tpu.dimension_semantics<arbitrary>], iteration_bounds = array<i64: 1>, scalar_prefetch = 0 : i64, scratch_operands = 0 : i64, tpu.core_type = #tpu.core_type<tc>, window_params = [{pipeline_mode = #tpu.pipeline_mode<synchronous>, transform_indices = @transform_0, window_bounds = array<i64: 32, 128>}, {pipeline_mode = #tpu.pipeline_mode<synchronous>, transform_indices = @transform_1, window_bounds = array<i64: 128, 256>}, {pipeline_mode = #tpu.pipeline_mode<synchronous>, transform_indices = @transform_2, window_bounds = array<i64: 1, 16>}, {pipeline_mode = #tpu.pipeline_mode<synchronous>, transform_indices = @transform_3, window_bounds = array<i64: 1, 16>}, {pipeline_mode = #tpu.pipeline_mode<synchronous>, transform_indices = @transform_4, window_bounds = array<i64: 9, 256>}, {pipeline_mode = #tpu.pipeline_mode<synchronous>, transform_indices = @transform_5, window_bounds = array<i64: 1, 16>}, {pipeline_mode = #tpu.pipeline_mode<synchronous>, transform_indices = @transform_6, window_bounds = array<i64: 1, 16>}, {pipeline_mode = #tpu.pipeline_mode<synchronous>, transform_indices = @transform_7, window_bounds = array<i64: 16, 4>}, {pipeline_mode = #tpu.pipeline_mode<synchronous>, transform_indices = @transform_8, window_bounds = array<i64: 1, 4>}, {pipeline_mode = #tpu.pipeline_mode<synchronous>, transform_indices = @transform_9, window_bounds = array<i64: 4, 16>}, {pipeline_mode = #tpu.pipeline_mode<synchronous>, transform_indices = @transform_10, window_bounds = array<i64: 1, 16>}, {pipeline_mode = #tpu.pipeline_mode<synchronous>, transform_indices = @transform_11, window_bounds = array<i64: 256, 128>}, {pipeline_mode = #tpu.pipeline_mode<synchronous>, transform_indices = @transform_12, window_bounds = array<i64: 1, 8>}, {pipeline_mode = #tpu.pipeline_mode<synchronous>, transform_indices = @transform_13, window_bounds = array<i64: 1, 8>}, {pipeline_mode = #tpu.pipeline_mode<synchronous>, transform_indices = @transform_14, window_bounds = array<i64: 256, 16>}, {pipeline_mode = #tpu.pipeline_mode<synchronous>, transform_indices = @transform_15, window_bounds = array<i64: 16, 256>}, {pipeline_mode = #tpu.pipeline_mode<synchronous>, transform_indices = @transform_16, window_bounds = array<i64: 256, 16>}, {pipeline_mode = #tpu.pipeline_mode<synchronous>, transform_indices = @transform_17, window_bounds = array<i64: 16, 256>}, {pipeline_mode = #tpu.pipeline_mode<synchronous>, transform_indices = @transform_18, window_bounds = array<i64: 128, 8>}, {pipeline_mode = #tpu.pipeline_mode<synchronous>, transform_indices = @transform_19, window_bounds = array<i64: 8, 128>}, {pipeline_mode = #tpu.pipeline_mode<synchronous>, transform_indices = @transform_20, window_bounds = array<i64: 32, 128>}]} {
    %c0 = arith.constant 0 : index
    %c0_0 = arith.constant 0 : index
    %0 = vector.load %arg1[%c0, %c0_0] : memref<32x128xf32, #tpu.memory_space<vmem>>, vector<32x128xf32>
    %1 = arith.truncf %0 : vector<32x128xf32> to vector<32x128xbf16>
    %c0_1 = arith.constant 0 : index
    %c0_2 = arith.constant 0 : index
    %2 = vector.load %arg2[%c0_1, %c0_2] : memref<128x256xbf16, #tpu.memory_space<vmem>>, vector<128x256xbf16>
    %cst = arith.constant dense<0.000000e+00> : vector<32x256xf32>
    %3 = tpu.matmul %1, %2, %cst {dimension_numbers = #tpu.dot_dimension_numbers<[1], [0], [0], [1], [0, 0, 1, 1], [], []>} : vector<32x128xbf16>, vector<128x256xbf16>, vector<32x256xf32> -> vector<32x256xf32>
    %c0_3 = arith.constant 0 : index
    %c0_4 = arith.constant 0 : index
    %4 = vector.load %arg3[%c0_3, %c0_4] : memref<1x16xf32, #tpu.memory_space<vmem>>, vector<1x16xf32>
    %c0_5 = arith.constant 0 : index
    %c0_6 = arith.constant 0 : index
    %5 = vector.load %arg4[%c0_5, %c0_6] : memref<1x16xf32, #tpu.memory_space<vmem>>, vector<1x16xf32>
    %c0_7 = arith.constant 0 : index
    %c0_8 = arith.constant 0 : index
    %6 = vector.load %arg15[%c0_7, %c0_8] : memref<256x16xf32, #tpu.memory_space<vmem>>, vector<256x16xf32>
    %c0_9 = arith.constant 0 : index
    %c0_10 = arith.constant 0 : index
    %7 = vector.load %arg16[%c0_9, %c0_10] : memref<16x256xf32, #tpu.memory_space<vmem>>, vector<16x256xf32>
    %cst_11 = arith.constant dense<0.000000e+00> : vector<256xf32>
    %8 = vector.multi_reduction <add>, %3, %cst_11 [0] : vector<32x256xf32> to vector<256xf32>
    %9 = vector.shape_cast %8 : vector<256xf32> to vector<1x256xf32>
    %10 = arith.mulf %3, %3 : vector<32x256xf32>
    %cst_12 = arith.constant dense<0.000000e+00> : vector<256xf32>
    %11 = vector.multi_reduction <add>, %10, %cst_12 [0] : vector<32x256xf32> to vector<256xf32>
    %12 = vector.shape_cast %11 : vector<256xf32> to vector<1x256xf32>
    %13 = tpu.concatenate %9, %12 in 0 : vector<1x256xf32>, vector<1x256xf32> -> vector<2x256xf32>
    %cst_13 = arith.constant dense<0.000000e+00> : vector<2x16xf32>
    %14 = tpu.matmul %13, %6, %cst_13 {dimension_numbers = #tpu.dot_dimension_numbers<[1], [0], [0], [1], [0, 0, 1, 1], [], []>} : vector<2x256xf32>, vector<256x16xf32>, vector<2x16xf32> -> vector<2x16xf32>
    %15 = vector.extract_strided_slice %14 {offsets = [0, 0], sizes = [1, 16], strides = [1, 1]} : vector<2x16xf32> to vector<1x16xf32>
    %cst_14 = arith.constant 0.001953125 : f32
    %16 = vector.broadcast %cst_14 : f32 to vector<1x16xf32>
    %17 = arith.mulf %15, %16 : vector<1x16xf32>
    %18 = vector.extract_strided_slice %14 {offsets = [1, 0], sizes = [1, 16], strides = [1, 1]} : vector<2x16xf32> to vector<1x16xf32>
    %cst_15 = arith.constant 0.001953125 : f32
    %19 = vector.broadcast %cst_15 : f32 to vector<1x16xf32>
    %20 = arith.mulf %18, %19 : vector<1x16xf32>
    %21 = arith.mulf %17, %17 : vector<1x16xf32>
    %22 = arith.subf %20, %21 : vector<1x16xf32>
    %cst_16 = arith.constant 9.99999974E-6 : f32
    %23 = vector.broadcast %cst_16 : f32 to vector<1x16xf32>
    %24 = arith.addf %22, %23 : vector<1x16xf32>
    %25 = math.rsqrt %24 : vector<1x16xf32>
    %26 = arith.mulf %4, %25 : vector<1x16xf32>
    %27 = arith.mulf %17, %26 : vector<1x16xf32>
    %28 = arith.subf %5, %27 : vector<1x16xf32>
    %29 = tpu.concatenate %26, %28 in 0 : vector<1x16xf32>, vector<1x16xf32> -> vector<2x16xf32>
    %cst_17 = arith.constant dense<0.000000e+00> : vector<2x256xf32>
    %30 = tpu.matmul %29, %7, %cst_17 {dimension_numbers = #tpu.dot_dimension_numbers<[1], [0], [0], [1], [0, 0, 1, 1], [], []>} : vector<2x16xf32>, vector<16x256xf32>, vector<2x256xf32> -> vector<2x256xf32>
    %31 = vector.extract_strided_slice %30 {offsets = [0, 0], sizes = [1, 256], strides = [1, 1]} : vector<2x256xf32> to vector<1x256xf32>
    %32 = vector.broadcast %31 : vector<1x256xf32> to vector<32x256xf32>
    %33 = arith.mulf %3, %32 : vector<32x256xf32>
    %34 = vector.extract_strided_slice %30 {offsets = [1, 0], sizes = [1, 256], strides = [1, 1]} : vector<2x256xf32> to vector<1x256xf32>
    %35 = vector.broadcast %34 : vector<1x256xf32> to vector<32x256xf32>
    %36 = arith.addf %33, %35 : vector<32x256xf32>
    %cst_18 = arith.constant 3.000000e+00 : f32
    %37 = vector.broadcast %cst_18 : f32 to vector<32x256xf32>
    %38 = arith.addf %36, %37 : vector<32x256xf32>
    %cst_19 = arith.constant 0.000000e+00 : f32
    %cst_20 = arith.constant 6.000000e+00 : f32
    %39 = vector.broadcast %cst_19 : f32 to vector<32x256xf32>
    %40 = arith.maximumf %39, %38 : vector<32x256xf32>
    %41 = vector.broadcast %cst_20 : f32 to vector<32x256xf32>
    %42 = arith.minimumf %41, %40 : vector<32x256xf32>
    %43 = arith.mulf %36, %42 : vector<32x256xf32>
    %cst_21 = arith.constant 0.166666672 : f32
    %44 = vector.broadcast %cst_21 : f32 to vector<32x256xf32>
    %45 = arith.mulf %43, %44 : vector<32x256xf32>
    %46 = tpu.iota {dimensions = array<i32: 0>} : vector<32x1xi32>
    %c16_i32 = arith.constant 16 : i32
    %c0_i32 = arith.constant 0 : i32
    %47 = arith.cmpi eq, %c16_i32, %c0_i32 : i32
    %c1_i32 = arith.constant 1 : i32
    %48 = arith.select %47, %c1_i32, %c16_i32 : i32
    %49 = vector.broadcast %48 : i32 to vector<32x1xi32>
    %50 = arith.remsi %46, %49 : vector<32x1xi32>
    %c0_i32_22 = arith.constant 0 : i32
    %51 = vector.broadcast %c0_i32_22 : i32 to vector<32x1xi32>
    %52 = arith.cmpi ne, %50, %51 : vector<32x1xi32>
    %c0_i32_23 = arith.constant 0 : i32
    %53 = vector.broadcast %c0_i32_23 : i32 to vector<32x1xi32>
    %54 = arith.cmpi slt, %50, %53 : vector<32x1xi32>
    %c0_i32_24 = arith.constant 0 : i32
    %55 = arith.cmpi slt, %48, %c0_i32_24 : i32
    %56 = vector.broadcast %55 : i1 to vector<32x1xi1>
    %57 = vector.broadcast %56 : vector<32x1xi1> to vector<32x1xi1>
    %58 = arith.xori %54, %57 : vector<32x1xi1>
    %59 = arith.andi %58, %52 : vector<32x1xi1>
    %60 = vector.broadcast %48 : i32 to vector<32x1xi32>
    %61 = arith.addi %50, %60 : vector<32x1xi32>
    %62 = arith.select %59, %61, %50 : vector<32x1xi1>, vector<32x1xi32>
    %c0_25 = arith.constant 0 : index
    %c0_26 = arith.constant 0 : index
    %63 = vector.load %arg5[%c0_25, %c0_26] : memref<9x256xf32, #tpu.memory_space<vmem>>, vector<9x256xf32>
    %cst_27 = arith.constant 0.000000e+00 : f32
    %64 = vector.broadcast %cst_27 : f32 to vector<32x256xf32>
    %c1_i32_28 = arith.constant 1 : i32
    %65 = tpu.dynamic_rotate %45 by %c1_i32_28 dim 0 : vector<32x256xf32>, i32 -> vector<32x256xf32>
    %c1_i32_29 = arith.constant 1 : i32
    %66 = vector.broadcast %c1_i32_29 : i32 to vector<32x1xi32>
    %67 = arith.cmpi sge, %62, %66 : vector<32x1xi32>
    %cst_30 = arith.constant 0.000000e+00 : f32
    %68 = vector.shape_cast %67 : vector<32x1xi1> to vector<32x1xi1>
    %69 = vector.broadcast %68 : vector<32x1xi1> to vector<32x256xi1>
    %70 = vector.broadcast %cst_30 : f32 to vector<32x256xf32>
    %71 = arith.select %69, %65, %70 : vector<32x256xi1>, vector<32x256xf32>
    %c16_i32_31 = arith.constant 16 : i32
    %72 = tpu.dynamic_rotate %71 by %c16_i32_31 dim 1 : vector<32x256xf32>, i32 -> vector<32x256xf32>
    %73 = vector.extract_strided_slice %63 {offsets = [0, 0], sizes = [1, 256], strides = [1, 1]} : vector<9x256xf32> to vector<1x256xf32>
    %74 = vector.broadcast %73 : vector<1x256xf32> to vector<32x256xf32>
    %75 = arith.mulf %72, %74 : vector<32x256xf32>
    %76 = arith.addf %64, %75 : vector<32x256xf32>
    %77 = vector.extract_strided_slice %63 {offsets = [1, 0], sizes = [1, 256], strides = [1, 1]} : vector<9x256xf32> to vector<1x256xf32>
    %78 = vector.broadcast %77 : vector<1x256xf32> to vector<32x256xf32>
    %79 = arith.mulf %71, %78 : vector<32x256xf32>
    %80 = arith.addf %76, %79 : vector<32x256xf32>
    %c240_i32 = arith.constant 240 : i32
    %81 = tpu.dynamic_rotate %71 by %c240_i32 dim 1 : vector<32x256xf32>, i32 -> vector<32x256xf32>
    %82 = vector.extract_strided_slice %63 {offsets = [2, 0], sizes = [1, 256], strides = [1, 1]} : vector<9x256xf32> to vector<1x256xf32>
    %83 = vector.broadcast %82 : vector<1x256xf32> to vector<32x256xf32>
    %84 = arith.mulf %81, %83 : vector<32x256xf32>
    %85 = arith.addf %80, %84 : vector<32x256xf32>
    %c16_i32_32 = arith.constant 16 : i32
    %86 = tpu.dynamic_rotate %45 by %c16_i32_32 dim 1 : vector<32x256xf32>, i32 -> vector<32x256xf32>
    %87 = vector.extract_strided_slice %63 {offsets = [3, 0], sizes = [1, 256], strides = [1, 1]} : vector<9x256xf32> to vector<1x256xf32>
    %88 = vector.broadcast %87 : vector<1x256xf32> to vector<32x256xf32>
    %89 = arith.mulf %86, %88 : vector<32x256xf32>
    %90 = arith.addf %85, %89 : vector<32x256xf32>
    %91 = vector.extract_strided_slice %63 {offsets = [4, 0], sizes = [1, 256], strides = [1, 1]} : vector<9x256xf32> to vector<1x256xf32>
    %92 = vector.broadcast %91 : vector<1x256xf32> to vector<32x256xf32>
    %93 = arith.mulf %45, %92 : vector<32x256xf32>
    %94 = arith.addf %90, %93 : vector<32x256xf32>
    %c240_i32_33 = arith.constant 240 : i32
    %95 = tpu.dynamic_rotate %45 by %c240_i32_33 dim 1 : vector<32x256xf32>, i32 -> vector<32x256xf32>
    %96 = vector.extract_strided_slice %63 {offsets = [5, 0], sizes = [1, 256], strides = [1, 1]} : vector<9x256xf32> to vector<1x256xf32>
    %97 = vector.broadcast %96 : vector<1x256xf32> to vector<32x256xf32>
    %98 = arith.mulf %95, %97 : vector<32x256xf32>
    %99 = arith.addf %94, %98 : vector<32x256xf32>
    %c31_i32 = arith.constant 31 : i32
    %100 = tpu.dynamic_rotate %45 by %c31_i32 dim 0 : vector<32x256xf32>, i32 -> vector<32x256xf32>
    %c15_i32 = arith.constant 15 : i32
    %101 = vector.broadcast %c15_i32 : i32 to vector<32x1xi32>
    %102 = arith.cmpi slt, %62, %101 : vector<32x1xi32>
    %cst_34 = arith.constant 0.000000e+00 : f32
    %103 = vector.shape_cast %102 : vector<32x1xi1> to vector<32x1xi1>
    %104 = vector.broadcast %103 : vector<32x1xi1> to vector<32x256xi1>
    %105 = vector.broadcast %cst_34 : f32 to vector<32x256xf32>
    %106 = arith.select %104, %100, %105 : vector<32x256xi1>, vector<32x256xf32>
    %c16_i32_35 = arith.constant 16 : i32
    %107 = tpu.dynamic_rotate %106 by %c16_i32_35 dim 1 : vector<32x256xf32>, i32 -> vector<32x256xf32>
    %108 = vector.extract_strided_slice %63 {offsets = [6, 0], sizes = [1, 256], strides = [1, 1]} : vector<9x256xf32> to vector<1x256xf32>
    %109 = vector.broadcast %108 : vector<1x256xf32> to vector<32x256xf32>
    %110 = arith.mulf %107, %109 : vector<32x256xf32>
    %111 = arith.addf %99, %110 : vector<32x256xf32>
    %112 = vector.extract_strided_slice %63 {offsets = [7, 0], sizes = [1, 256], strides = [1, 1]} : vector<9x256xf32> to vector<1x256xf32>
    %113 = vector.broadcast %112 : vector<1x256xf32> to vector<32x256xf32>
    %114 = arith.mulf %106, %113 : vector<32x256xf32>
    %115 = arith.addf %111, %114 : vector<32x256xf32>
    %c240_i32_36 = arith.constant 240 : i32
    %116 = tpu.dynamic_rotate %106 by %c240_i32_36 dim 1 : vector<32x256xf32>, i32 -> vector<32x256xf32>
    %117 = vector.extract_strided_slice %63 {offsets = [8, 0], sizes = [1, 256], strides = [1, 1]} : vector<9x256xf32> to vector<1x256xf32>
    %118 = vector.broadcast %117 : vector<1x256xf32> to vector<32x256xf32>
    %119 = arith.mulf %116, %118 : vector<32x256xf32>
    %120 = arith.addf %115, %119 : vector<32x256xf32>
    %c0_37 = arith.constant 0 : index
    %c0_38 = arith.constant 0 : index
    %121 = vector.load %arg6[%c0_37, %c0_38] : memref<1x16xf32, #tpu.memory_space<vmem>>, vector<1x16xf32>
    %c0_39 = arith.constant 0 : index
    %c0_40 = arith.constant 0 : index
    %122 = vector.load %arg7[%c0_39, %c0_40] : memref<1x16xf32, #tpu.memory_space<vmem>>, vector<1x16xf32>
    %c0_41 = arith.constant 0 : index
    %c0_42 = arith.constant 0 : index
    %123 = vector.load %arg17[%c0_41, %c0_42] : memref<256x16xf32, #tpu.memory_space<vmem>>, vector<256x16xf32>
    %c0_43 = arith.constant 0 : index
    %c0_44 = arith.constant 0 : index
    %124 = vector.load %arg18[%c0_43, %c0_44] : memref<16x256xf32, #tpu.memory_space<vmem>>, vector<16x256xf32>
    %cst_45 = arith.constant dense<0.000000e+00> : vector<256xf32>
    %125 = vector.multi_reduction <add>, %120, %cst_45 [0] : vector<32x256xf32> to vector<256xf32>
    %126 = vector.shape_cast %125 : vector<256xf32> to vector<1x256xf32>
    %127 = arith.mulf %120, %120 : vector<32x256xf32>
    %cst_46 = arith.constant dense<0.000000e+00> : vector<256xf32>
    %128 = vector.multi_reduction <add>, %127, %cst_46 [0] : vector<32x256xf32> to vector<256xf32>
    %129 = vector.shape_cast %128 : vector<256xf32> to vector<1x256xf32>
    %130 = tpu.concatenate %126, %129 in 0 : vector<1x256xf32>, vector<1x256xf32> -> vector<2x256xf32>
    %cst_47 = arith.constant dense<0.000000e+00> : vector<2x16xf32>
    %131 = tpu.matmul %130, %123, %cst_47 {dimension_numbers = #tpu.dot_dimension_numbers<[1], [0], [0], [1], [0, 0, 1, 1], [], []>} : vector<2x256xf32>, vector<256x16xf32>, vector<2x16xf32> -> vector<2x16xf32>
    %132 = vector.extract_strided_slice %131 {offsets = [0, 0], sizes = [1, 16], strides = [1, 1]} : vector<2x16xf32> to vector<1x16xf32>
    %cst_48 = arith.constant 0.001953125 : f32
    %133 = vector.broadcast %cst_48 : f32 to vector<1x16xf32>
    %134 = arith.mulf %132, %133 : vector<1x16xf32>
    %135 = vector.extract_strided_slice %131 {offsets = [1, 0], sizes = [1, 16], strides = [1, 1]} : vector<2x16xf32> to vector<1x16xf32>
    %cst_49 = arith.constant 0.001953125 : f32
    %136 = vector.broadcast %cst_49 : f32 to vector<1x16xf32>
    %137 = arith.mulf %135, %136 : vector<1x16xf32>
    %138 = arith.mulf %134, %134 : vector<1x16xf32>
    %139 = arith.subf %137, %138 : vector<1x16xf32>
    %cst_50 = arith.constant 9.99999974E-6 : f32
    %140 = vector.broadcast %cst_50 : f32 to vector<1x16xf32>
    %141 = arith.addf %139, %140 : vector<1x16xf32>
    %142 = math.rsqrt %141 : vector<1x16xf32>
    %143 = arith.mulf %121, %142 : vector<1x16xf32>
    %144 = arith.mulf %134, %143 : vector<1x16xf32>
    %145 = arith.subf %122, %144 : vector<1x16xf32>
    %146 = tpu.concatenate %143, %145 in 0 : vector<1x16xf32>, vector<1x16xf32> -> vector<2x16xf32>
    %cst_51 = arith.constant dense<0.000000e+00> : vector<2x256xf32>
    %147 = tpu.matmul %146, %124, %cst_51 {dimension_numbers = #tpu.dot_dimension_numbers<[1], [0], [0], [1], [0, 0, 1, 1], [], []>} : vector<2x16xf32>, vector<16x256xf32>, vector<2x256xf32> -> vector<2x256xf32>
    %148 = vector.extract_strided_slice %147 {offsets = [0, 0], sizes = [1, 256], strides = [1, 1]} : vector<2x256xf32> to vector<1x256xf32>
    %149 = vector.broadcast %148 : vector<1x256xf32> to vector<32x256xf32>
    %150 = arith.mulf %120, %149 : vector<32x256xf32>
    %151 = vector.extract_strided_slice %147 {offsets = [1, 0], sizes = [1, 256], strides = [1, 1]} : vector<2x256xf32> to vector<1x256xf32>
    %152 = vector.broadcast %151 : vector<1x256xf32> to vector<32x256xf32>
    %153 = arith.addf %150, %152 : vector<32x256xf32>
    %cst_52 = arith.constant 3.000000e+00 : f32
    %154 = vector.broadcast %cst_52 : f32 to vector<32x256xf32>
    %155 = arith.addf %153, %154 : vector<32x256xf32>
    %cst_53 = arith.constant 0.000000e+00 : f32
    %cst_54 = arith.constant 6.000000e+00 : f32
    %156 = vector.broadcast %cst_53 : f32 to vector<32x256xf32>
    %157 = arith.maximumf %156, %155 : vector<32x256xf32>
    %158 = vector.broadcast %cst_54 : f32 to vector<32x256xf32>
    %159 = arith.minimumf %158, %157 : vector<32x256xf32>
    %160 = arith.mulf %153, %159 : vector<32x256xf32>
    %cst_55 = arith.constant 0.166666672 : f32
    %161 = vector.broadcast %cst_55 : f32 to vector<32x256xf32>
    %162 = arith.mulf %160, %161 : vector<32x256xf32>
    %163 = vector.shape_cast %162 : vector<32x256xf32> to vector<2x16x256xf32>
    %cst_56 = arith.constant dense<0.000000e+00> : vector<2x256xf32>
    %164 = vector.multi_reduction <add>, %163, %cst_56 [1] : vector<2x16x256xf32> to vector<2x256xf32>
    %c0_57 = arith.constant 0 : index
    %c0_58 = arith.constant 0 : index
    %165 = vector.load %arg17[%c0_57, %c0_58] : memref<256x16xf32, #tpu.memory_space<vmem>>, vector<256x16xf32>
    %cst_59 = arith.constant dense<0.000000e+00> : vector<2x16xf32>
    %166 = tpu.matmul %164, %165, %cst_59 {dimension_numbers = #tpu.dot_dimension_numbers<[1], [0], [0], [1], [0, 0, 1, 1], [], []>} : vector<2x256xf32>, vector<256x16xf32>, vector<2x16xf32> -> vector<2x16xf32>
    %cst_60 = arith.constant 3.906250e-03 : f32
    %167 = vector.broadcast %cst_60 : f32 to vector<2x16xf32>
    %168 = arith.mulf %166, %167 : vector<2x16xf32>
    %c0_61 = arith.constant 0 : index
    %c0_62 = arith.constant 0 : index
    %169 = vector.load %arg8[%c0_61, %c0_62] : memref<16x4xf32, #tpu.memory_space<vmem>>, vector<16x4xf32>
    %cst_63 = arith.constant dense<0.000000e+00> : vector<2x4xf32>
    %170 = tpu.matmul %168, %169, %cst_63 {dimension_numbers = #tpu.dot_dimension_numbers<[1], [0], [0], [1], [0, 0, 1, 1], [], []>} : vector<2x16xf32>, vector<16x4xf32>, vector<2x4xf32> -> vector<2x4xf32>
    %c0_64 = arith.constant 0 : index
    %c0_65 = arith.constant 0 : index
    %171 = vector.load %arg9[%c0_64, %c0_65] : memref<1x4xf32, #tpu.memory_space<vmem>>, vector<1x4xf32>
    %172 = vector.broadcast %171 : vector<1x4xf32> to vector<2x4xf32>
    %173 = arith.addf %170, %172 : vector<2x4xf32>
    %cst_66 = arith.constant 0.000000e+00 : f32
    %174 = vector.broadcast %cst_66 : f32 to vector<2x4xf32>
    %175 = arith.maximumf %173, %174 : vector<2x4xf32>
    %c0_67 = arith.constant 0 : index
    %c0_68 = arith.constant 0 : index
    %176 = vector.load %arg10[%c0_67, %c0_68] : memref<4x16xf32, #tpu.memory_space<vmem>>, vector<4x16xf32>
    %cst_69 = arith.constant dense<0.000000e+00> : vector<2x16xf32>
    %177 = tpu.matmul %175, %176, %cst_69 {dimension_numbers = #tpu.dot_dimension_numbers<[1], [0], [0], [1], [0, 0, 1, 1], [], []>} : vector<2x4xf32>, vector<4x16xf32>, vector<2x16xf32> -> vector<2x16xf32>
    %c0_70 = arith.constant 0 : index
    %c0_71 = arith.constant 0 : index
    %178 = vector.load %arg11[%c0_70, %c0_71] : memref<1x16xf32, #tpu.memory_space<vmem>>, vector<1x16xf32>
    %179 = vector.broadcast %178 : vector<1x16xf32> to vector<2x16xf32>
    %180 = arith.addf %177, %179 : vector<2x16xf32>
    %181 = arith.negf %180 : vector<2x16xf32>
    %182 = math.exp %181 : vector<2x16xf32>
    %cst_72 = arith.constant 1.000000e+00 : f32
    %183 = vector.broadcast %cst_72 : f32 to vector<2x16xf32>
    %184 = arith.addf %183, %182 : vector<2x16xf32>
    %185 = arith.divf %183, %184 : vector<2x16xf32>
    %c0_73 = arith.constant 0 : index
    %c0_74 = arith.constant 0 : index
    %186 = vector.load %arg18[%c0_73, %c0_74] : memref<16x256xf32, #tpu.memory_space<vmem>>, vector<16x256xf32>
    %cst_75 = arith.constant dense<0.000000e+00> : vector<2x256xf32>
    %187 = tpu.matmul %185, %186, %cst_75 {dimension_numbers = #tpu.dot_dimension_numbers<[1], [0], [0], [1], [0, 0, 1, 1], [], []>} : vector<2x16xf32>, vector<16x256xf32>, vector<2x256xf32> -> vector<2x256xf32>
    %188 = vector.shape_cast %187 : vector<2x256xf32> to vector<2x1x256xf32>
    %189 = vector.broadcast %188 : vector<2x1x256xf32> to vector<2x16x256xf32>
    %190 = arith.mulf %163, %189 : vector<2x16x256xf32>
    %191 = vector.shape_cast %190 : vector<2x16x256xf32> to vector<32x256xf32>
    %192 = arith.truncf %191 : vector<32x256xf32> to vector<32x256xbf16>
    %c0_76 = arith.constant 0 : index
    %c0_77 = arith.constant 0 : index
    %193 = vector.load %arg12[%c0_76, %c0_77] : memref<256x128xbf16, #tpu.memory_space<vmem>>, vector<256x128xbf16>
    %cst_78 = arith.constant dense<0.000000e+00> : vector<32x128xf32>
    %194 = tpu.matmul %192, %193, %cst_78 {dimension_numbers = #tpu.dot_dimension_numbers<[1], [0], [0], [1], [0, 0, 1, 1], [], []>} : vector<32x256xbf16>, vector<256x128xbf16>, vector<32x128xf32> -> vector<32x128xf32>
    %c0_79 = arith.constant 0 : index
    %c0_80 = arith.constant 0 : index
    %195 = vector.load %arg13[%c0_79, %c0_80] : memref<1x8xf32, #tpu.memory_space<vmem>>, vector<1x8xf32>
    %c0_81 = arith.constant 0 : index
    %c0_82 = arith.constant 0 : index
    %196 = vector.load %arg14[%c0_81, %c0_82] : memref<1x8xf32, #tpu.memory_space<vmem>>, vector<1x8xf32>
    %c0_83 = arith.constant 0 : index
    %c0_84 = arith.constant 0 : index
    %197 = vector.load %arg19[%c0_83, %c0_84] : memref<128x8xf32, #tpu.memory_space<vmem>>, vector<128x8xf32>
    %c0_85 = arith.constant 0 : index
    %c0_86 = arith.constant 0 : index
    %198 = vector.load %arg20[%c0_85, %c0_86] : memref<8x128xf32, #tpu.memory_space<vmem>>, vector<8x128xf32>
    %cst_87 = arith.constant dense<0.000000e+00> : vector<128xf32>
    %199 = vector.multi_reduction <add>, %194, %cst_87 [0] : vector<32x128xf32> to vector<128xf32>
    %200 = vector.shape_cast %199 : vector<128xf32> to vector<1x128xf32>
    %201 = arith.mulf %194, %194 : vector<32x128xf32>
    %cst_88 = arith.constant dense<0.000000e+00> : vector<128xf32>
    %202 = vector.multi_reduction <add>, %201, %cst_88 [0] : vector<32x128xf32> to vector<128xf32>
    %203 = vector.shape_cast %202 : vector<128xf32> to vector<1x128xf32>
    %204 = tpu.concatenate %200, %203 in 0 : vector<1x128xf32>, vector<1x128xf32> -> vector<2x128xf32>
    %cst_89 = arith.constant dense<0.000000e+00> : vector<2x8xf32>
    %205 = tpu.matmul %204, %197, %cst_89 {dimension_numbers = #tpu.dot_dimension_numbers<[1], [0], [0], [1], [0, 0, 1, 1], [], []>} : vector<2x128xf32>, vector<128x8xf32>, vector<2x8xf32> -> vector<2x8xf32>
    %206 = vector.extract_strided_slice %205 {offsets = [0, 0], sizes = [1, 8], strides = [1, 1]} : vector<2x8xf32> to vector<1x8xf32>
    %cst_90 = arith.constant 0.001953125 : f32
    %207 = vector.broadcast %cst_90 : f32 to vector<1x8xf32>
    %208 = arith.mulf %206, %207 : vector<1x8xf32>
    %209 = vector.extract_strided_slice %205 {offsets = [1, 0], sizes = [1, 8], strides = [1, 1]} : vector<2x8xf32> to vector<1x8xf32>
    %cst_91 = arith.constant 0.001953125 : f32
    %210 = vector.broadcast %cst_91 : f32 to vector<1x8xf32>
    %211 = arith.mulf %209, %210 : vector<1x8xf32>
    %212 = arith.mulf %208, %208 : vector<1x8xf32>
    %213 = arith.subf %211, %212 : vector<1x8xf32>
    %cst_92 = arith.constant 9.99999974E-6 : f32
    %214 = vector.broadcast %cst_92 : f32 to vector<1x8xf32>
    %215 = arith.addf %213, %214 : vector<1x8xf32>
    %216 = math.rsqrt %215 : vector<1x8xf32>
    %217 = arith.mulf %195, %216 : vector<1x8xf32>
    %218 = arith.mulf %208, %217 : vector<1x8xf32>
    %219 = arith.subf %196, %218 : vector<1x8xf32>
    %220 = tpu.concatenate %217, %219 in 0 : vector<1x8xf32>, vector<1x8xf32> -> vector<2x8xf32>
    %cst_93 = arith.constant dense<0.000000e+00> : vector<2x128xf32>
    %221 = tpu.matmul %220, %198, %cst_93 {dimension_numbers = #tpu.dot_dimension_numbers<[1], [0], [0], [1], [0, 0, 1, 1], [], []>} : vector<2x8xf32>, vector<8x128xf32>, vector<2x128xf32> -> vector<2x128xf32>
    %222 = vector.extract_strided_slice %221 {offsets = [0, 0], sizes = [1, 128], strides = [1, 1]} : vector<2x128xf32> to vector<1x128xf32>
    %223 = vector.broadcast %222 : vector<1x128xf32> to vector<32x128xf32>
    %224 = arith.mulf %194, %223 : vector<32x128xf32>
    %225 = vector.extract_strided_slice %221 {offsets = [1, 0], sizes = [1, 128], strides = [1, 1]} : vector<2x128xf32> to vector<1x128xf32>
    %226 = vector.broadcast %225 : vector<1x128xf32> to vector<32x128xf32>
    %227 = arith.addf %224, %226 : vector<32x128xf32>
    %c0_94 = arith.constant 0 : index
    %c0_95 = arith.constant 0 : index
    %228 = vector.load %arg1[%c0_94, %c0_95] : memref<32x128xf32, #tpu.memory_space<vmem>>, vector<32x128xf32>
    %229 = arith.addf %227, %228 : vector<32x128xf32>
    %c0_96 = arith.constant 0 : index
    %c0_97 = arith.constant 0 : index
    %230 = vector.load %arg21[%c0_96, %c0_97] : memref<32x128xf32, #tpu.memory_space<vmem>>, vector<32x128xf32>
    tpu.vector_store %arg21[%c0_96, %c0_97], %229 {strides = array<i32>} : memref<32x128xf32, #tpu.memory_space<vmem>>, vector<32x128xf32>,
    return
  }
  func.func @transform_0(%arg0: i32) -> (i32, i32) {
    %c0_i32 = arith.constant 0 : i32
    %c0_i32_0 = arith.constant 0 : i32
    %c0_i32_1 = arith.constant 0 : i32
    return %c0_i32, %c0_i32_0 : i32, i32
  }
  func.func @transform_1(%arg0: i32) -> (i32, i32) {
    %c0_i32 = arith.constant 0 : i32
    %c0_i32_0 = arith.constant 0 : i32
    %c0_i32_1 = arith.constant 0 : i32
    return %c0_i32, %c0_i32_0 : i32, i32
  }
  func.func @transform_2(%arg0: i32) -> (i32, i32) {
    %c0_i32 = arith.constant 0 : i32
    %c0_i32_0 = arith.constant 0 : i32
    %c0_i32_1 = arith.constant 0 : i32
    return %c0_i32, %c0_i32_0 : i32, i32
  }
  func.func @transform_3(%arg0: i32) -> (i32, i32) {
    %c0_i32 = arith.constant 0 : i32
    %c0_i32_0 = arith.constant 0 : i32
    %c0_i32_1 = arith.constant 0 : i32
    return %c0_i32, %c0_i32_0 : i32, i32
  }
  func.func @transform_4(%arg0: i32) -> (i32, i32) {
    %c0_i32 = arith.constant 0 : i32
    %c0_i32_0 = arith.constant 0 : i32
    %c0_i32_1 = arith.constant 0 : i32
    return %c0_i32, %c0_i32_0 : i32, i32
  }
  func.func @transform_5(%arg0: i32) -> (i32, i32) {
    %c0_i32 = arith.constant 0 : i32
    %c0_i32_0 = arith.constant 0 : i32
    %c0_i32_1 = arith.constant 0 : i32
    return %c0_i32, %c0_i32_0 : i32, i32
  }
  func.func @transform_6(%arg0: i32) -> (i32, i32) {
    %c0_i32 = arith.constant 0 : i32
    %c0_i32_0 = arith.constant 0 : i32
    %c0_i32_1 = arith.constant 0 : i32
    return %c0_i32, %c0_i32_0 : i32, i32
  }
  func.func @transform_7(%arg0: i32) -> (i32, i32) {
    %c0_i32 = arith.constant 0 : i32
    %c0_i32_0 = arith.constant 0 : i32
    %c0_i32_1 = arith.constant 0 : i32
    return %c0_i32, %c0_i32_0 : i32, i32
  }
  func.func @transform_8(%arg0: i32) -> (i32, i32) {
    %c0_i32 = arith.constant 0 : i32
    %c0_i32_0 = arith.constant 0 : i32
    %c0_i32_1 = arith.constant 0 : i32
    return %c0_i32, %c0_i32_0 : i32, i32
  }
  func.func @transform_9(%arg0: i32) -> (i32, i32) {
    %c0_i32 = arith.constant 0 : i32
    %c0_i32_0 = arith.constant 0 : i32
    %c0_i32_1 = arith.constant 0 : i32
    return %c0_i32, %c0_i32_0 : i32, i32
  }
  func.func @transform_10(%arg0: i32) -> (i32, i32) {
    %c0_i32 = arith.constant 0 : i32
    %c0_i32_0 = arith.constant 0 : i32
    %c0_i32_1 = arith.constant 0 : i32
    return %c0_i32, %c0_i32_0 : i32, i32
  }
  func.func @transform_11(%arg0: i32) -> (i32, i32) {
    %c0_i32 = arith.constant 0 : i32
    %c0_i32_0 = arith.constant 0 : i32
    %c0_i32_1 = arith.constant 0 : i32
    return %c0_i32, %c0_i32_0 : i32, i32
  }
  func.func @transform_12(%arg0: i32) -> (i32, i32) {
    %c0_i32 = arith.constant 0 : i32
    %c0_i32_0 = arith.constant 0 : i32
    %c0_i32_1 = arith.constant 0 : i32
    return %c0_i32, %c0_i32_0 : i32, i32
  }
  func.func @transform_13(%arg0: i32) -> (i32, i32) {
    %c0_i32 = arith.constant 0 : i32
    %c0_i32_0 = arith.constant 0 : i32
    %c0_i32_1 = arith.constant 0 : i32
    return %c0_i32, %c0_i32_0 : i32, i32
  }
  func.func @transform_14(%arg0: i32) -> (i32, i32) {
    %c0_i32 = arith.constant 0 : i32
    %c0_i32_0 = arith.constant 0 : i32
    %c0_i32_1 = arith.constant 0 : i32
    return %c0_i32, %c0_i32_0 : i32, i32
  }
  func.func @transform_15(%arg0: i32) -> (i32, i32) {
    %c0_i32 = arith.constant 0 : i32
    %c0_i32_0 = arith.constant 0 : i32
    %c0_i32_1 = arith.constant 0 : i32
    return %c0_i32, %c0_i32_0 : i32, i32
  }
  func.func @transform_16(%arg0: i32) -> (i32, i32) {
    %c0_i32 = arith.constant 0 : i32
    %c0_i32_0 = arith.constant 0 : i32
    %c0_i32_1 = arith.constant 0 : i32
    return %c0_i32, %c0_i32_0 : i32, i32
  }
  func.func @transform_17(%arg0: i32) -> (i32, i32) {
    %c0_i32 = arith.constant 0 : i32
    %c0_i32_0 = arith.constant 0 : i32
    %c0_i32_1 = arith.constant 0 : i32
    return %c0_i32, %c0_i32_0 : i32, i32
  }
  func.func @transform_18(%arg0: i32) -> (i32, i32) {
    %c0_i32 = arith.constant 0 : i32
    %c0_i32_0 = arith.constant 0 : i32
    %c0_i32_1 = arith.constant 0 : i32
    return %c0_i32, %c0_i32_0 : i32, i32
  }
  func.func @transform_19(%arg0: i32) -> (i32, i32) {
    %c0_i32 = arith.constant 0 : i32
    %c0_i32_0 = arith.constant 0 : i32
    %c0_i32_1 = arith.constant 0 : i32
    return %c0_i32, %c0_i32_0 : i32, i32
  }
  func.func @transform_20(%arg0: i32) -> (i32, i32) {
    %c0_i32 = arith.constant 0 : i32
    %c0_i32_0 = arith.constant 0 : i32
    %c0_i32_1 = arith.constant 0 : i32
    return %c0_i32, %c0_i32_0 : i32, i32
  }
}

</mosaic_0001>

<llo_original>
// kernel: tpu_custom_call.1
$region0: #{tpu_custom_call.1}
  #allocation0 [shape = 'u32[]', space=smem, size = 0x4, offset = 0x4, fixed_abs, tag = 'smem constant byte address 0x4 - core index']
  #allocation1 [shape = 'u32[144,128]{1,0:T(1,128)}', space=vmem, size = 0x12000, scoped, tag = 'internal scratch']
  %s0 = inlined_call_operand.vmem [shape: f32[32,128], index: 0, kind: input, shape index: {}]
  %s1 = inlined_call_operand.vmem [shape: bf16[128,256], index: 1, kind: input, shape index: {}]
  %s2 = inlined_call_operand.vmem [shape: f32[1,16], index: 2, kind: input, shape index: {}]
  %s3 = inlined_call_operand.vmem [shape: f32[1,16], index: 3, kind: input, shape index: {}]
  %s4 = inlined_call_operand.vmem [shape: f32[9,256], index: 4, kind: input, shape index: {}]
  %s5 = inlined_call_operand.vmem [shape: f32[1,16], index: 5, kind: input, shape index: {}]
  %s6 = inlined_call_operand.vmem [shape: f32[1,16], index: 6, kind: input, shape index: {}]
  %s7 = inlined_call_operand.vmem [shape: f32[16,4], index: 7, kind: input, shape index: {}]
  %s8 = inlined_call_operand.vmem [shape: f32[1,4], index: 8, kind: input, shape index: {}]
  %s9 = inlined_call_operand.vmem [shape: f32[4,16], index: 9, kind: input, shape index: {}]
  %s10 = inlined_call_operand.vmem [shape: f32[1,16], index: 10, kind: input, shape index: {}]
  %s11 = inlined_call_operand.vmem [shape: bf16[256,128], index: 11, kind: input, shape index: {}]
  %s12 = inlined_call_operand.vmem [shape: f32[1,8], index: 12, kind: input, shape index: {}]
  %s13 = inlined_call_operand.vmem [shape: f32[1,8], index: 13, kind: input, shape index: {}]
  %s14 = inlined_call_operand.vmem [shape: f32[256,16], index: 14, kind: input, shape index: {}]
  %s15 = inlined_call_operand.vmem [shape: f32[16,256], index: 15, kind: input, shape index: {}]
  %s16 = inlined_call_operand.vmem [shape: f32[256,16], index: 16, kind: input, shape index: {}]
  %s17 = inlined_call_operand.vmem [shape: f32[16,256], index: 17, kind: input, shape index: {}]
  %s18 = inlined_call_operand.vmem [shape: f32[128,8], index: 18, kind: input, shape index: {}]
  %s19 = inlined_call_operand.vmem [shape: f32[8,128], index: 19, kind: input, shape index: {}]
  %s20 = inlined_call_operand.hbm [shape: f32[32,128], index: 20, kind: output, shape index: {}]
  %s21 = sld [smem:[#allocation0]]
  $region90: #{tpu_custom_call.1} parent=0
    _
  %s23 = ssub.s32 1, %s21
  %s24 = scalar_select 0, %s23, %s21
  $region1: #{tpu_custom_call.1} parent=0
    #allocation2 [shape = 'u8[16384]{0}', space=vmem, size = 0x4000, scoped, tag = 'output window, operand 0, single buffered']
    #allocation3 [shape = 's32[1]{0}', space=sflag, size = 0x4, scoped, tag = 'scoped memory for tpu_custom_call.1']
    %25 = vsyncpa [#allocation3], 0
    // Predicated region
    $region2: #{tpu_custom_call.1} parent=1 // pred_check
      _
    $region3: #{tpu_custom_call.1} parent=1 // pred_check_branch
      %27 = sbr.rel (0) target = $region5
    $region4: #{tpu_custom_call.1} parent=1 // pred_region
      _
    $region5: #{tpu_custom_call.1} parent=1 // pred_fallthru
      _
    // Predicated region
    $region6: #{tpu_custom_call.1} parent=1 // pred_check
      _
    $region7: #{tpu_custom_call.1} parent=1 // pred_check_branch
      %29 = sbr.rel (0) target = $region9
    $region8: #{tpu_custom_call.1} parent=1 // pred_region
      _
    $region9: #{tpu_custom_call.1} parent=1 // pred_fallthru
      _
    // Predicated region
    $region10: #{tpu_custom_call.1} parent=1 // pred_check
      _
    $region11: #{tpu_custom_call.1} parent=1 // pred_check_branch
      %31 = sbr.rel (0) target = $region13
    $region12: #{tpu_custom_call.1} parent=1 // pred_region
      _
    $region13: #{tpu_custom_call.1} parent=1 // pred_fallthru
      _
    // Predicated region
    $region14: #{tpu_custom_call.1} parent=1 // pred_check
      _
    $region15: #{tpu_custom_call.1} parent=1 // pred_check_branch
      %33 = sbr.rel (0) target = $region17
    $region16: #{tpu_custom_call.1} parent=1 // pred_region
      _
    $region17: #{tpu_custom_call.1} parent=1 // pred_fallthru
      _
    // Predicated region
    $region18: #{tpu_custom_call.1} parent=1 // pred_check
      _
    $region19: #{tpu_custom_call.1} parent=1 // pred_check_branch
      %35 = sbr.rel (0) target = $region21
    $region20: #{tpu_custom_call.1} parent=1 // pred_region
      _
    $region21: #{tpu_custom_call.1} parent=1 // pred_fallthru
      _
    // Predicated region
    $region22: #{tpu_custom_call.1} parent=1 // pred_check
      _
    $region23: #{tpu_custom_call.1} parent=1 // pred_check_branch
      %37 = sbr.rel (0) target = $region25
    $region24: #{tpu_custom_call.1} parent=1 // pred_region
      _
    $region25: #{tpu_custom_call.1} parent=1 // pred_fallthru
      _
    // Predicated region
    $region26: #{tpu_custom_call.1} parent=1 // pred_check
      _
    $region27: #{tpu_custom_call.1} parent=1 // pred_check_branch
      %39 = sbr.rel (0) target = $region29
    $region28: #{tpu_custom_call.1} parent=1 // pred_region
      _
    $region29: #{tpu_custom_call.1} parent=1 // pred_fallthru
      _
    // Predicated region
    $region30: #{tpu_custom_call.1} parent=1 // pred_check
      _
    $region31: #{tpu_custom_call.1} parent=1 // pred_check_branch
      %41 = sbr.rel (0) target = $region33
    $region32: #{tpu_custom_call.1} parent=1 // pred_region
      _
    $region33: #{tpu_custom_call.1} parent=1 // pred_fallthru
      _
    // Predicated region
    $region34: #{tpu_custom_call.1} parent=1 // pred_check
      _
    $region35: #{tpu_custom_call.1} parent=1 // pred_check_branch
      %43 = sbr.rel (0) target = $region37
    $region36: #{tpu_custom_call.1} parent=1 // pred_region
      _
    $region37: #{tpu_custom_call.1} parent=1 // pred_fallthru
      _
    // Predicated region
    $region38: #{tpu_custom_call.1} parent=1 // pred_check
      _
    $region39: #{tpu_custom_call.1} parent=1 // pred_check_branch
      %45 = sbr.rel (0) target = $region41
    $region40: #{tpu_custom_call.1} parent=1 // pred_region
      _
    $region41: #{tpu_custom_call.1} parent=1 // pred_fallthru
      _
    // Predicated region
    $region42: #{tpu_custom_call.1} parent=1 // pred_check
      _
    $region43: #{tpu_custom_call.1} parent=1 // pred_check_branch
      %47 = sbr.rel (0) target = $region45
    $region44: #{tpu_custom_call.1} parent=1 // pred_region
      _
    $region45: #{tpu_custom_call.1} parent=1 // pred_fallthru
      _
    // Predicated region
    $region46: #{tpu_custom_call.1} parent=1 // pred_check
      _
    $region47: #{tpu_custom_call.1} parent=1 // pred_check_branch
      %49 = sbr.rel (0) target = $region49
    $region48: #{tpu_custom_call.1} parent=1 // pred_region
      _
    $region49: #{tpu_custom_call.1} parent=1 // pred_fallthru
      _
    // Predicated region
    $region50: #{tpu_custom_call.1} parent=1 // pred_check
      _
    $region51: #{tpu_custom_call.1} parent=1 // pred_check_branch
      %51 = sbr.rel (0) target = $region53
    $region52: #{tpu_custom_call.1} parent=1 // pred_region
      _
    $region53: #{tpu_custom_call.1} parent=1 // pred_fallthru
      _
    // Predicated region
    $region54: #{tpu_custom_call.1} parent=1 // pred_check
      _
    $region55: #{tpu_custom_call.1} parent=1 // pred_check_branch
      %53 = sbr.rel (0) target = $region57
    $region56: #{tpu_custom_call.1} parent=1 // pred_region
      _
    $region57: #{tpu_custom_call.1} parent=1 // pred_fallthru
      _
    // Predicated region
    $region58: #{tpu_custom_call.1} parent=1 // pred_check
      _
    $region59: #{tpu_custom_call.1} parent=1 // pred_check_branch
      %55 = sbr.rel (0) target = $region61
    $region60: #{tpu_custom_call.1} parent=1 // pred_region
      _
    $region61: #{tpu_custom_call.1} parent=1 // pred_fallthru
      _
    // Predicated region
    $region62: #{tpu_custom_call.1} parent=1 // pred_check
      _
    $region63: #{tpu_custom_call.1} parent=1 // pred_check_branch
      %57 = sbr.rel (0) target = $region65
    $region64: #{tpu_custom_call.1} parent=1 // pred_region
      _
    $region65: #{tpu_custom_call.1} parent=1 // pred_fallthru
      _
    // Predicated region
    $region66: #{tpu_custom_call.1} parent=1 // pred_check
      _
    $region67: #{tpu_custom_call.1} parent=1 // pred_check_branch
      %59 = sbr.rel (0) target = $region69
    $region68: #{tpu_custom_call.1} parent=1 // pred_region
      _
    $region69: #{tpu_custom_call.1} parent=1 // pred_fallthru
      _
    // Predicated region
    $region70: #{tpu_custom_call.1} parent=1 // pred_check
      _
    $region71: #{tpu_custom_call.1} parent=1 // pred_check_branch
      %61 = sbr.rel (0) target = $region73
    $region72: #{tpu_custom_call.1} parent=1 // pred_region
      _
    $region73: #{tpu_custom_call.1} parent=1 // pred_fallthru
      _
    // Predicated region
    $region74: #{tpu_custom_call.1} parent=1 // pred_check
      _
    $region75: #{tpu_custom_call.1} parent=1 // pred_check_branch
      %63 = sbr.rel (0) target = $region77
    $region76: #{tpu_custom_call.1} parent=1 // pred_region
      _
    $region77: #{tpu_custom_call.1} parent=1 // pred_fallthru
      _
    // Predicated region
    $region78: #{tpu_custom_call.1} parent=1 // pred_check
      _
    $region79: #{tpu_custom_call.1} parent=1 // pred_check_branch
      %65 = sbr.rel (0) target = $region81
    $region80: #{tpu_custom_call.1} parent=1 // pred_region
      _
    $region81: #{tpu_custom_call.1} parent=1 // pred_fallthru
      _
    %v67 = vld [vmem:[%s0] sm:$0xff]
    %v68 = vld [vmem:[%s0 + $0x8] sm:$0xff]
    %v69 = vld [vmem:[%s0 + $0x10] sm:$0xff]
    %v70 = vld [vmem:[%s0 + $0x18] sm:$0xff]
    %v71 = vpack.c.bf16 %v68, %v67
    %v72 = vpack.c.bf16 %v70, %v69
    %v73 = vld [vmem:[%s1] sm:$0xff]
    %v74 = vld [vmem:[%s1 + $0x8] sm:$0xff]
    %v75 = vld [vmem:[%s1 + $0x10] sm:$0xff]
    %v76 = vld [vmem:[%s1 + $0x18] sm:$0xff]
    %v77 = vld [vmem:[%s1 + $0x20] sm:$0xff]
    %v78 = vld [vmem:[%s1 + $0x28] sm:$0xff]
    %v79 = vld [vmem:[%s1 + $0x30] sm:$0xff]
    %v80 = vld [vmem:[%s1 + $0x38] sm:$0xff]
    %v81 = vld [vmem:[%s1 + $0x40] sm:$0xff]
    %v82 = vld [vmem:[%s1 + $0x48] sm:$0xff]
    %v83 = vld [vmem:[%s1 + $0x50] sm:$0xff]
    %v84 = vld [vmem:[%s1 + $0x58] sm:$0xff]
    %v85 = vld [vmem:[%s1 + $0x60] sm:$0xff]
    %v86 = vld [vmem:[%s1 + $0x68] sm:$0xff]
    %v87 = vld [vmem:[%s1 + $0x70] sm:$0xff]
    %v88 = vld [vmem:[%s1 + $0x78] sm:$0xff]
    %v105 = vunpack.c.l.b16 %v73
    %v106 = vunpack.c.h.b16 %v73
    %v107 = vunpack.c.l.b16 %v74
    %v108 = vunpack.c.h.b16 %v74
    %v109 = vunpack.c.l.b16 %v75
    %v110 = vunpack.c.h.b16 %v75
    %v111 = vunpack.c.l.b16 %v76
    %v112 = vunpack.c.h.b16 %v76
    %v113 = vunpack.c.l.b16 %v77
    %v114 = vunpack.c.h.b16 %v77
    %v115 = vunpack.c.l.b16 %v78
    %v116 = vunpack.c.h.b16 %v78
    %v117 = vunpack.c.l.b16 %v79
    %v118 = vunpack.c.h.b16 %v79
    %v119 = vunpack.c.l.b16 %v80
    %v120 = vunpack.c.h.b16 %v80
    %v121 = vunpack.c.l.b16 %v81
    %v122 = vunpack.c.h.b16 %v81
    %v123 = vunpack.c.l.b16 %v82
    %v124 = vunpack.c.h.b16 %v82
    %v125 = vunpack.c.l.b16 %v83
    %v126 = vunpack.c.h.b16 %v83
    %v127 = vunpack.c.l.b16 %v84
    %v128 = vunpack.c.h.b16 %v84
    %v129 = vunpack.c.l.b16 %v85
    %v130 = vunpack.c.h.b16 %v85
    %v131 = vunpack.c.l.b16 %v86
    %v132 = vunpack.c.h.b16 %v86
    %v133 = vunpack.c.l.b16 %v87
    %v134 = vunpack.c.h.b16 %v87
    %v135 = vunpack.c.l.b16 %v88
    %v136 = vunpack.c.h.b16 %v88
    %v137 = vpack.c.b16 %v107, %v105
    %v138 = vpack.c.b16 %v108, %v106
    %v139 = vpack.c.b16 %v111, %v109
    %v140 = vpack.c.b16 %v112, %v110
    %v141 = vpack.c.b16 %v115, %v113
    %v142 = vpack.c.b16 %v116, %v114
    %v143 = vpack.c.b16 %v119, %v117
    %v144 = vpack.c.b16 %v120, %v118
    %v145 = vpack.c.b16 %v123, %v121
    %v146 = vpack.c.b16 %v124, %v122
    %v147 = vpack.c.b16 %v127, %v125
    %v148 = vpack.c.b16 %v128, %v126
    %v149 = vpack.c.b16 %v131, %v129
    %v150 = vpack.c.b16 %v132, %v130
    %v151 = vpack.c.b16 %v135, %v133
    %v152 = vpack.c.b16 %v136, %v134
    %169 = vmatprep.subr.bf16.mxu0 %v152
    %170 = vmatpush1.bf16.msra.mxu0 %v151
    %171 = vmatprep.subr.bf16.mxu0 %v150
    %172 = vmatpush1.bf16.msra.mxu0 %v149
    %173 = vmatprep.subr.bf16.mxu0 %v148
    %174 = vmatpush1.bf16.msra.mxu0 %v147
    %175 = vmatprep.subr.bf16.mxu0 %v146
    %176 = vmatpush1.bf16.msra.mxu0 %v145
    %177 = vmatprep.subr.bf16.mxu0 %v144
    %178 = vmatpush1.bf16.msra.mxu0 %v143
    %179 = vmatprep.subr.bf16.mxu0 %v142
    %180 = vmatpush1.bf16.msra.mxu0 %v141
    %181 = vmatprep.subr.bf16.mxu0 %v140
    %182 = vmatpush1.bf16.msra.mxu0 %v139
    %183 = vmatprep.subr.bf16.mxu0 %v138
    %184 = vmatpush1.bf16.msra.mxu0 %v137
    %185 = vmatprep.subr.bf16.mxu0 0
    %186 = vmatpush2.bf16.msra.mxu0 0
    %187 = vmatprep.subr.bf16.mxu0 0
    %188 = vmatpush2.bf16.msra.mxu0 0
    %189 = vmatprep.subr.bf16.mxu0 0
    %190 = vmatpush2.bf16.msra.mxu0 0
    %191 = vmatprep.subr.bf16.mxu0 0
    %192 = vmatpush2.bf16.msra.mxu0 0
    %193 = vmatprep.subr.bf16.mxu0 0
    %194 = vmatpush2.bf16.msra.mxu0 0
    %195 = vmatprep.subr.bf16.mxu0 0
    %196 = vmatpush2.bf16.msra.mxu0 0
    %197 = vmatprep.subr.bf16.mxu0 0
    %198 = vmatpush2.bf16.msra.mxu0 0
    %199 = vmatprep.subr.bf16.mxu0 0
    %200 = vmatpush2.bf16.msra.mxu0 0
    %201 = vmatprep.mubr.bf16.mxu0 0
    %202 = vmatmul.mubr.bf16.gmra.mxu0 %v71
    %v203 = vpop.f32.mrf.mxu0
    %v204 = vadd.f32 0.0, %v203
    %v205 = vpop.f32.mrf.mxu0
    %v206 = vadd.f32 0.0, %v205
    %v207 = vpop.f32.mrf.mxu0
    %v208 = vadd.f32 0.0, %v207
    %v209 = vpop.f32.mrf.mxu0
    %v210 = vadd.f32 0.0, %v209
    %211 = vmatprep.mubr.bf16.mxu0 0
    %212 = vmatmul.mubr.bf16.gmra.mxu0 %v72
    %v213 = vpop.f32.mrf.mxu0
    %v214 = vadd.f32 0.0, %v213
    %v215 = vpop.f32.mrf.mxu0
    %v216 = vadd.f32 0.0, %v215
    %v217 = vpop.f32.mrf.mxu0
    %v218 = vadd.f32 0.0, %v217
    %v219 = vpop.f32.mrf.mxu0
    %v220 = vadd.f32 0.0, %v219
    %221 = vdwg.mxu0
    %v222 = vld [vmem:[%s2] sm:$0x1]
    %v223 = vld [vmem:[%s3] sm:$0x1]
    %v224 = vld [vmem:[%s14] sm:$0xff]
    %v225 = vld [vmem:[%s14 + $0x8] sm:$0xff]
    %v226 = vld [vmem:[%s14 + $0x10] sm:$0xff]
    %v227 = vld [vmem:[%s14 + $0x18] sm:$0xff]
    %v228 = vld [vmem:[%s14 + $0x20] sm:$0xff]
    %v229 = vld [vmem:[%s14 + $0x28] sm:$0xff]
    %v230 = vld [vmem:[%s14 + $0x30] sm:$0xff]
    %v231 = vld [vmem:[%s14 + $0x38] sm:$0xff]
    %v232 = vld [vmem:[%s14 + $0x40] sm:$0xff]
    %v233 = vld [vmem:[%s14 + $0x48] sm:$0xff]
    %v234 = vld [vmem:[%s14 + $0x50] sm:$0xff]
    %v235 = vld [vmem:[%s14 + $0x58] sm:$0xff]
    %v236 = vld [vmem:[%s14 + $0x60] sm:$0xff]
    %v237 = vld [vmem:[%s14 + $0x68] sm:$0xff]
    %v238 = vld [vmem:[%s14 + $0x70] sm:$0xff]
    %v239 = vld [vmem:[%s14 + $0x78] sm:$0xff]
    %v240 = vld [vmem:[%s14 + $0x80] sm:$0xff]
    %v241 = vld [vmem:[%s14 + $0x88] sm:$0xff]
    %v242 = vld [vmem:[%s14 + $0x90] sm:$0xff]
    %v243 = vld [vmem:[%s14 + $0x98] sm:$0xff]
    %v244 = vld [vmem:[%s14 + $0xa0] sm:$0xff]
    %v245 = vld [vmem:[%s14 + $0xa8] sm:$0xff]
    %v246 = vld [vmem:[%s14 + $0xb0] sm:$0xff]
    %v247 = vld [vmem:[%s14 + $0xb8] sm:$0xff]
    %v248 = vld [vmem:[%s14 + $0xc0] sm:$0xff]
    %v249 = vld [vmem:[%s14 + $0xc8] sm:$0xff]
    %v250 = vld [vmem:[%s14 + $0xd0] sm:$0xff]
    %v251 = vld [vmem:[%s14 + $0xd8] sm:$0xff]
    %v252 = vld [vmem:[%s14 + $0xe0] sm:$0xff]
    %v253 = vld [vmem:[%s14 + $0xe8] sm:$0xff]
    %v254 = vld [vmem:[%s14 + $0xf0] sm:$0xff]
    %v255 = vld [vmem:[%s14 + $0xf8] sm:$0xff]
    %v256 = vld [vmem:[%s15] sm:$0xff]
    %v257 = vld [vmem:[%s15 + $0x8] sm:$0xff]
    %v258 = vld [vmem:[%s15 + $0x10] sm:$0xff]
    %v259 = vld [vmem:[%s15 + $0x18] sm:$0xff]
    %v260 = vadd.f32 %v204, %v208
    %v261 = vadd.f32 %v260, %v214
    %v262 = vadd.f32 %v261, %v218
    %v263 = vrot.slane %v262, 4
    %v264 = vadd.f32 %v262, %v263
    %v265 = vrot.slane %v264, 2
    %v266 = vadd.f32 %v264, %v265
    %v267 = vrot.slane %v266, 1
    %v268 = vadd.f32 %v266, %v267
    %v269 = vadd.f32 %v206, %v210
    %v270 = vadd.f32 %v269, %v216
    %v271 = vadd.f32 %v270, %v220
    %v272 = vrot.slane %v271, 4
    %v273 = vadd.f32 %v271, %v272
    %v274 = vrot.slane %v273, 2
    %v275 = vadd.f32 %v273, %v274
    %v276 = vrot.slane %v275, 1
    %v277 = vadd.f32 %v275, %v276
    %v278 = vmul.f32 %v204, %v204
    %v279 = vmul.f32 %v206, %v206
    %v280 = vmul.f32 %v208, %v208
    %v281 = vmul.f32 %v210, %v210
    %v282 = vmul.f32 %v214, %v214
    %v283 = vmul.f32 %v216, %v216
    %v284 = vmul.f32 %v218, %v218
    %v285 = vmul.f32 %v220, %v220
    %v286 = vadd.f32 %v278, %v280
    %v287 = vadd.f32 %v286, %v282
    %v288 = vadd.f32 %v287, %v284
    %v289 = vrot.slane %v288, 4
    %v290 = vadd.f32 %v288, %v289
    %v291 = vrot.slane %v290, 2
    %v292 = vadd.f32 %v290, %v291
    %v293 = vrot.slane %v292, 1
    %v294 = vadd.f32 %v292, %v293
    %v295 = vadd.f32 %v279, %v281
    %v296 = vadd.f32 %v295, %v283
    %v297 = vadd.f32 %v296, %v285
    %v298 = vrot.slane %v297, 4
    %v299 = vadd.f32 %v297, %v298
    %v300 = vrot.slane %v299, 2
    %v301 = vadd.f32 %v299, %v300
    %v302 = vrot.slane %v301, 1
    %v303 = vadd.f32 %v301, %v302
    %vm304 = vcmask 1040384
    %v305 = vsel %vm304, %v268, %v294
    %v306 = vsel %vm304, %v277, %v303
    %307 = vmatprep.subr.mxu0 0.0
    %308 = vmatpush1.msra.mxu0 %v239
    %309 = vmatprep.subr.mxu0 0.0
    %310 = vmatpush1.msra.mxu0 %v238
    %311 = vmatprep.subr.mxu0 0.0
    %312 = vmatpush1.msra.mxu0 %v237
    %313 = vmatprep.subr.mxu0 0.0
    %314 = vmatpush1.msra.mxu0 %v236
    %315 = vmatprep.subr.mxu0 0.0
    %316 = vmatpush1.msra.mxu0 %v235
    %317 = vmatprep.subr.mxu0 0.0
    %318 = vmatpush1.msra.mxu0 %v234
    %319 = vmatprep.subr.mxu0 0.0
    %320 = vmatpush1.msra.mxu0 %v233
    %321 = vmatprep.subr.mxu0 0.0
    %322 = vmatpush1.msra.mxu0 %v232
    %323 = vmatprep.subr.mxu0 0.0
    %324 = vmatpush1.msra.mxu0 %v231
    %325 = vmatprep.subr.mxu0 0.0
    %326 = vmatpush1.msra.mxu0 %v230
    %327 = vmatprep.subr.mxu0 0.0
    %328 = vmatpush1.msra.mxu0 %v229
    %329 = vmatprep.subr.mxu0 0.0
    %330 = vmatpush1.msra.mxu0 %v228
    %331 = vmatprep.subr.mxu0 0.0
    %332 = vmatpush1.msra.mxu0 %v227
    %333 = vmatprep.subr.mxu0 0.0
    %334 = vmatpush1.msra.mxu0 %v226
    %335 = vmatprep.subr.mxu0 0.0
    %336 = vmatpush1.msra.mxu0 %v225
    %337 = vmatprep.subr.mxu0 0.0
    %338 = vmatpush1.msra.mxu0 %v224
    %339 = vmatprep.subr.mxu0 0.0
    %340 = vmatpush2.msra.mxu0 %v255
    %341 = vmatprep.subr.mxu0 0.0
    %342 = vmatpush2.msra.mxu0 %v254
    %343 = vmatprep.subr.mxu0 0.0
    %344 = vmatpush2.msra.mxu0 %v253
    %345 = vmatprep.subr.mxu0 0.0
    %346 = vmatpush2.msra.mxu0 %v252
    %347 = vmatprep.subr.mxu0 0.0
    %348 = vmatpush2.msra.mxu0 %v251
    %349 = vmatprep.subr.mxu0 0.0
    %350 = vmatpush2.msra.mxu0 %v250
    %351 = vmatprep.subr.mxu0 0.0
    %352 = vmatpush2.msra.mxu0 %v249
    %353 = vmatprep.subr.mxu0 0.0
    %354 = vmatpush2.msra.mxu0 %v248
    %355 = vmatprep.subr.mxu0 0.0
    %356 = vmatpush2.msra.mxu0 %v247
    %357 = vmatprep.subr.mxu0 0.0
    %358 = vmatpush2.msra.mxu0 %v246
    %359 = vmatprep.subr.mxu0 0.0
    %360 = vmatpush2.msra.mxu0 %v245
    %361 = vmatprep.subr.mxu0 0.0
    %362 = vmatpush2.msra.mxu0 %v244
    %363 = vmatprep.subr.mxu0 0.0
    %364 = vmatpush2.msra.mxu0 %v243
    %365 = vmatprep.subr.mxu0 0.0
    %366 = vmatpush2.msra.mxu0 %v242
    %367 = vmatprep.subr.mxu0 0.0
    %368 = vmatpush2.msra.mxu0 %v241
    %369 = vmatprep.subr.mxu0 0.0
    %370 = vmatpush2.msra.mxu0 %v240
    %371 = vmatprep.mubr.f32.mxu0 %v306
    %372 = vmatmul.mubr.f32.gmra.mxu0 %v305
    %v373 = vpop.f32.mrf.mxu0
    %v374 = vadd.f32 0.0, %v373
    %v375 = vpop.f32.mrf.mxu0
    %376 = vdwg.mxu0
    %v377 = vmul.f32 %v374, 0.001953125
    %v378 = vmul.f32 %v377, %v377
    %v380 = vrot.slane %v378, 7
    %v382 = vsub.f32 %v377, %v380
    %v383 = vadd.f32 %v382, 1e-05
    %v384 = vrsqrt.pop %v383
    %v387 = vunpack.c.l.s4 1966171168
    %v388 = vunpack.c.0.s8 %v387
    %v389 = vlaneseq
    %v390 = vshrl.u32 %v389, 7
    %v391 = vsub.s32 %v388, %v390
    %v392 = vrot.slane %v384, %v391
    %v393 = vcombine.high %v392, %v392
    %v395 = vunpack.c.l.s4 1966171168
    %v396 = vunpack.c.0.s8 %v395
    %v397 = vlaneseq
    %v398 = vshrl.u32 %v397, 7
    %v399 = vsub.s32 %v396, %v398
    %v400 = vrot.slane %v393, %v399
    %v402 = vmul.f32 %v222, %v400
    %v403 = vmul.f32 %v377, %v402
    %v404 = vsub.f32 %v223, %v403
    %v406 = vlaneseq
    %v407 = vshrl.u32 %v406, 7
    %v408 = vsub.s32 0, %v407
    %v409 = vrot.slane %v404, %v408
    %v411 = vsel %vm304, %v402, %v409
    %vm412 = vcmask 130048
    %v414 = vsel %vm412, %v411, 0
    %416 = vmatprep.subr.mxu0 0.0
    %417 = vmatpush1.msra.mxu0 0.0
    %418 = vmatprep.subr.mxu0 0.0
    %419 = vmatpush1.msra.mxu0 0.0
    %420 = vmatprep.subr.mxu0 0.0
    %421 = vmatpush1.msra.mxu0 0.0
    %422 = vmatprep.subr.mxu0 0.0
    %423 = vmatpush1.msra.mxu0 0.0
    %424 = vmatprep.subr.mxu0 0.0
    %425 = vmatpush1.msra.mxu0 0.0
    %426 = vmatprep.subr.mxu0 0.0
    %427 = vmatpush1.msra.mxu0 0.0
    %428 = vmatprep.subr.mxu0 0.0
    %429 = vmatpush1.msra.mxu0 0.0
    %430 = vmatprep.subr.mxu0 0.0
    %431 = vmatpush1.msra.mxu0 0.0
    %432 = vmatprep.subr.mxu0 0.0
    %433 = vmatpush1.msra.mxu0 0.0
    %434 = vmatprep.subr.mxu0 0.0
    %435 = vmatpush1.msra.mxu0 0.0
    %436 = vmatprep.subr.mxu0 0.0
    %437 = vmatpush1.msra.mxu0 0.0
    %438 = vmatprep.subr.mxu0 0.0
    %439 = vmatpush1.msra.mxu0 0.0
    %440 = vmatprep.subr.mxu0 0.0
    %441 = vmatpush1.msra.mxu0 0.0
    %442 = vmatprep.subr.mxu0 0.0
    %443 = vmatpush1.msra.mxu0 0.0
    %444 = vmatprep.subr.mxu0 %v259
    %445 = vmatpush1.msra.mxu0 %v258
    %446 = vmatprep.subr.mxu0 %v257
    %447 = vmatpush1.msra.mxu0 %v256
    %448 = vmatprep.subr.mxu0 0.0
    %449 = vmatpush2.msra.mxu0 0.0
    %450 = vmatprep.subr.mxu0 0.0
    %451 = vmatpush2.msra.mxu0 0.0
    %452 = vmatprep.subr.mxu0 0.0
    %453 = vmatpush2.msra.mxu0 0.0
    %454 = vmatprep.subr.mxu0 0.0
    %455 = vmatpush2.msra.mxu0 0.0
    %456 = vmatprep.subr.mxu0 0.0
    %457 = vmatpush2.msra.mxu0 0.0
    %458 = vmatprep.subr.mxu0 0.0
    %459 = vmatpush2.msra.mxu0 0.0
    %460 = vmatprep.subr.mxu0 0.0
    %461 = vmatpush2.msra.mxu0 0.0
    %462 = vmatprep.subr.mxu0 0.0
    %463 = vmatpush2.msra.mxu0 0.0
    %464 = vmatprep.subr.mxu0 0.0
    %465 = vmatpush2.msra.mxu0 0.0
    %466 = vmatprep.subr.mxu0 0.0
    %467 = vmatpush2.msra.mxu0 0.0
    %468 = vmatprep.subr.mxu0 0.0
    %469 = vmatpush2.msra.mxu0 0.0
    %470 = vmatprep.subr.mxu0 0.0
    %471 = vmatpush2.msra.mxu0 0.0
    %472 = vmatprep.subr.mxu0 0.0
    %473 = vmatpush2.msra.mxu0 0.0
    %474 = vmatprep.subr.mxu0 0.0
    %475 = vmatpush2.msra.mxu0 0.0
    %476 = vmatprep.subr.mxu0 0.0
    %477 = vmatpush2.msra.mxu0 0.0
    %478 = vmatprep.subr.mxu0 0.0
    %479 = vmatpush2.msra.mxu0 0.0
    %480 = vmatprep.mubr.f32.mxu0 0.0
    %481 = vmatmul.mubr.f32.gmra.mxu0 %v414
    %v482 = vpop.f32.mrf.mxu0
    %v483 = vadd.f32 0.0, %v482
    %v484 = vpop.f32.mrf.mxu0
    %v485 = vadd.f32 0.0, %v484
    %486 = vdwg.mxu0
    %v487 = vlaneseq
    %v488 = vshrl.u32 %v487, 7
    %v489 = vsub.s32 0, %v488
    %v490 = vrot.slane %v483, %v489
    %v491 = vlaneseq
    %v492 = vshrl.u32 %v491, 7
    %v493 = vsub.s32 0, %v492
    %v494 = vrot.slane %v485, %v493
    %v495 = vmul.f32 %v204, %v490
    %v496 = vmul.f32 %v206, %v494
    %v497 = vmul.f32 %v208, %v490
    %v498 = vmul.f32 %v210, %v494
    %v499 = vmul.f32 %v214, %v490
    %v500 = vmul.f32 %v216, %v494
    %v501 = vmul.f32 %v218, %v490
    %v502 = vmul.f32 %v220, %v494
    %v503 = vlaneseq
    %v504 = vshrl.u32 %v503, 7
    %v505 = vsub.s32 1, %v504
    %v506 = vrot.slane %v483, %v505
    %v507 = vlaneseq
    %v508 = vshrl.u32 %v507, 7
    %v509 = vsub.s32 1, %v508
    %v510 = vrot.slane %v485, %v509
    %v511 = vadd.f32 %v495, %v506
    %v512 = vadd.f32 %v496, %v510
    %v513 = vadd.f32 %v497, %v506
    %v514 = vadd.f32 %v498, %v510
    %v515 = vadd.f32 %v499, %v506
    %v516 = vadd.f32 %v500, %v510
    %v517 = vadd.f32 %v501, %v506
    %v518 = vadd.f32 %v502, %v510
    %v519 = vadd.f32 %v511, 3.0
    %v520 = vadd.f32 %v512, 3.0
    %v521 = vadd.f32 %v513, 3.0
    %v522 = vadd.f32 %v514, 3.0
    %v523 = vadd.f32 %v515, 3.0
    %v524 = vadd.f32 %v516, 3.0
    %v525 = vadd.f32 %v517, 3.0
    %v526 = vadd.f32 %v518, 3.0
    %v527 = vmax.f32 %v519, 0.0
    %v528 = vmax.f32 %v520, 0.0
    %v529 = vmax.f32 %v521, 0.0
    %v530 = vmax.f32 %v522, 0.0
    %v531 = vmax.f32 %v523, 0.0
    %v532 = vmax.f32 %v524, 0.0
    %v533 = vmax.f32 %v525, 0.0
    %v534 = vmax.f32 %v526, 0.0
    %v535 = vmin.f32 %v527, 6.0
    %v536 = vmin.f32 %v528, 6.0
    %v537 = vmin.f32 %v529, 6.0
    %v538 = vmin.f32 %v530, 6.0
    %v539 = vmin.f32 %v531, 6.0
    %v540 = vmin.f32 %v532, 6.0
    %v541 = vmin.f32 %v533, 6.0
    %v542 = vmin.f32 %v534, 6.0
    %v543 = vmul.f32 %v511, %v535
    %v544 = vmul.f32 %v512, %v536
    %v545 = vmul.f32 %v513, %v537
    %v546 = vmul.f32 %v514, %v538
    %v547 = vmul.f32 %v515, %v539
    %v548 = vmul.f32 %v516, %v540
    %v549 = vmul.f32 %v517, %v541
    %v550 = vmul.f32 %v518, %v542
    %v551 = vmul.f32 %v543, 0.16666667
    %v552 = vmul.f32 %v544, 0.16666667
    %v553 = vmul.f32 %v545, 0.16666667
    %v554 = vmul.f32 %v546, 0.16666667
    %v555 = vmul.f32 %v547, 0.16666667
    %v556 = vmul.f32 %v548, 0.16666667
    %v557 = vmul.f32 %v549, 0.16666667
    %v558 = vmul.f32 %v550, 0.16666667
    %v559 = vlaneseq
    %v560 = vshrl.u32 %v559, 7
    %v561 = vadd.s32 %v560, 8
    %v562 = vadd.s32 %v560, 16
    %v563 = vadd.s32 %v560, 24
    %vm564 = vcmp.lt.s32.totalorder %v560, 0
    %v565 = vsub.s32 0, %v560
    %v566 = vsel %vm564, %v565, %v560
    %v567 = vshrl.u32 %v566, 4
    %v568 = vand.u32 %v566, 15
    %v569 = vsub.s32 0, %v568
    %v570 = vsel %vm564, %v569, %v568
    %vm571 = vcmp.lt.s32.totalorder %v561, 0
    %v572 = vsub.s32 0, %v561
    %v573 = vsel %vm571, %v572, %v561
    %v574 = vshrl.u32 %v573, 4
    %v575 = vand.u32 %v573, 15
    %v576 = vsub.s32 0, %v575
    %v577 = vsel %vm571, %v576, %v575
    %vm578 = vcmp.lt.s32.totalorder %v562, 0
    %v579 = vsub.s32 0, %v562
    %v580 = vsel %vm578, %v579, %v562
    %v581 = vshrl.u32 %v580, 4
    %v582 = vand.u32 %v580, 15
    %v583 = vsub.s32 0, %v582
    %v584 = vsel %vm578, %v583, %v582
    %vm585 = vcmp.lt.s32.totalorder %v563, 0
    %v586 = vsub.s32 0, %v563
    %v587 = vsel %vm585, %v586, %v563
    %v588 = vshrl.u32 %v587, 4
    %v589 = vand.u32 %v587, 15
    %v590 = vsub.s32 0, %v589
    %v591 = vsel %vm585, %v590, %v589
    %vm592 = vcmp.ne.s32.totalorder %v570, 0
    %vm593 = vcmp.ne.s32.totalorder %v577, 0
    %vm594 = vcmp.ne.s32.totalorder %v584, 0
    %vm595 = vcmp.ne.s32.totalorder %v591, 0
    %vm596 = vcmp.lt.s32.totalorder %v570, 0
    %vm597 = vcmp.lt.s32.totalorder %v577, 0
    %vm598 = vcmp.lt.s32.totalorder %v584, 0
    %vm599 = vcmp.lt.s32.totalorder %v591, 0
    %vm600 = vmand %vm596, %vm592
    %vm601 = vmand %vm597, %vm593
    %vm602 = vmand %vm598, %vm594
    %vm603 = vmand %vm599, %vm595
    %v604 = vadd.s32 %v570, 16
    %v605 = vadd.s32 %v577, 16
    %v606 = vadd.s32 %v584, 16
    %v607 = vadd.s32 %v591, 16
    %v608 = vsel %vm600, %v604, %v570
    %v609 = vsel %vm601, %v605, %v577
    %v610 = vsel %vm602, %v606, %v584
    %v611 = vsel %vm603, %v607, %v591
    %v612 = vld [vmem:[%s4] sm:$0xff]
    %v613 = vld [vmem:[%s4 + $0x8] sm:$0xff]
    %v614 = vld [vmem:[%s4 + $0x10] sm:$0x1]
    %v615 = vld [vmem:[%s4 + $0x18] sm:$0x1]
    %v616 = vrot.slane %v551, 7
    %v617 = vrot.slane %v552, 7
    %v618 = vrot.slane %v553, 7
    %v619 = vrot.slane %v554, 7
    %v620 = vrot.slane %v555, 7
    %v621 = vrot.slane %v556, 7
    %v622 = vrot.slane %v557, 7
    %v623 = vrot.slane %v558, 7
    %vm624 = vcmp.lt.s32.totalorder %v560, 1
    %v625 = vsel %vm624, %v620, %v622
    %v626 = vsel %vm624, %v621, %v623
    %v627 = vsel %vm624, %v618, %v620
    %v628 = vsel %vm624, %v619, %v621
    %v629 = vsel %vm624, %v616, %v618
    %v630 = vsel %vm624, %v617, %v619
    %v631 = vsel %vm624, %v622, %v616
    %v632 = vsel %vm624, %v623, %v617
    %vm633 = vcmp.ge.s32.totalorder %v608, 1
    %vm634 = vcmp.ge.s32.totalorder %v609, 1
    %vm635 = vcmp.ge.s32.totalorder %v610, 1
    %vm636 = vcmp.ge.s32.totalorder %v611, 1
    %v637 = vsel %vm633, 1, 0
    %v638 = vsel %vm634, 1, 0
    %v639 = vsel %vm635, 1, 0
    %v640 = vsel %vm636, 1, 0
    %vm641 = vcmp.eq.s32.totalorder %v637, 1
    %vm642 = vcmp.eq.s32.totalorder %v638, 1
    %vm643 = vcmp.eq.s32.totalorder %v639, 1
    %vm644 = vcmp.eq.s32.totalorder %v640, 1
    %v645 = vsel %vm641, %v631, 0.0
    %v646 = vsel %vm641, %v632, 0.0
    %v647 = vsel %vm642, %v629, 0.0
    %v648 = vsel %vm642, %v630, 0.0
    %v649 = vsel %vm643, %v627, 0.0
    %v650 = vsel %vm643, %v628, 0.0
    %v651 = vsel %vm644, %v625, 0.0
    %v652 = vsel %vm644, %v626, 0.0
    %653 = vrot.lane.b32.xlu0 %v645, 16
    %v654 = vpop.permute.xlu0 %653
    %655 = vrot.lane.b32.xlu0 %v647, 16
    %v656 = vpop.permute.xlu0 %655
    %657 = vrot.lane.b32.xlu0 %v649, 16
    %v658 = vpop.permute.xlu0 %657
    %659 = vrot.lane.b32.xlu0 %v651, 16
    %v660 = vpop.permute.xlu0 %659
    %661 = vrot.lane.b32.xlu0 %v646, 16
    %v662 = vpop.permute.xlu0 %661
    %663 = vrot.lane.b32.xlu0 %v648, 16
    %v664 = vpop.permute.xlu0 %663
    %665 = vrot.lane.b32.xlu0 %v650, 16
    %v666 = vpop.permute.xlu0 %665
    %667 = vrot.lane.b32.xlu0 %v652, 16
    %v668 = vpop.permute.xlu0 %667
    %v669 = vlaneseq
    %v670 = vand.u32 %v669, 127
    %vm671 = vcmp.lt.s32.totalorder %v670, 16
    %v672 = vsel %vm671, %v654, %v662
    %v673 = vsel %vm671, %v656, %v664
    %v674 = vsel %vm671, %v658, %v666
    %v675 = vsel %vm671, %v660, %v668
    %v676 = vsel %vm671, %v662, %v654
    %v677 = vsel %vm671, %v664, %v656
    %v678 = vsel %vm671, %v666, %v658
    %v679 = vsel %vm671, %v668, %v660
    %v680 = vlaneseq
    %v681 = vshrl.u32 %v680, 7
    %v682 = vsub.s32 0, %v681
    %v683 = vrot.slane %v612, %v682
    %v684 = vlaneseq
    %v685 = vshrl.u32 %v684, 7
    %v686 = vsub.s32 0, %v685
    %v687 = vrot.slane %v613, %v686
    %v688 = vmul.f32 %v676, %v683
    %v689 = vmul.f32 %v672, %v687
    %v690 = vmul.f32 %v677, %v683
    %v691 = vmul.f32 %v673, %v687
    %v692 = vmul.f32 %v678, %v683
    %v693 = vmul.f32 %v674, %v687
    %v694 = vmul.f32 %v679, %v683
    %v695 = vmul.f32 %v675, %v687
    %v696 = vadd.f32 %v688, 0.0
    %v697 = vadd.f32 %v689, 0.0
    %v698 = vadd.f32 %v690, 0.0
    %v699 = vadd.f32 %v691, 0.0
    %v700 = vadd.f32 %v692, 0.0
    %v701 = vadd.f32 %v693, 0.0
    %v702 = vadd.f32 %v694, 0.0
    %v703 = vadd.f32 %v695, 0.0
    %v704 = vlaneseq
    %v705 = vshrl.u32 %v704, 7
    %v706 = vsub.s32 1, %v705
    %v707 = vrot.slane %v612, %v706
    %v708 = vlaneseq
    %v709 = vshrl.u32 %v708, 7
    %v710 = vsub.s32 1, %v709
    %v711 = vrot.slane %v613, %v710
    %v712 = vmul.f32 %v645, %v707
    %v713 = vmul.f32 %v646, %v711
    %v714 = vmul.f32 %v647, %v707
    %v715 = vmul.f32 %v648, %v711
    %v716 = vmul.f32 %v649, %v707
    %v717 = vmul.f32 %v650, %v711
    %v718 = vmul.f32 %v651, %v707
    %v719 = vmul.f32 %v652, %v711
    %v720 = vadd.f32 %v696, %v712
    %v721 = vadd.f32 %v697, %v713
    %v722 = vadd.f32 %v698, %v714
    %v723 = vadd.f32 %v699, %v715
    %v724 = vadd.f32 %v700, %v716
    %v725 = vadd.f32 %v701, %v717
    %v726 = vadd.f32 %v702, %v718
    %v727 = vadd.f32 %v703, %v719
    %728 = vrot.lane.b32.xlu0 %v645, 112
    %v729 = vpop.permute.xlu0 %728
    %730 = vrot.lane.b32.xlu0 %v647, 112
    %v731 = vpop.permute.xlu0 %730
    %732 = vrot.lane.b32.xlu0 %v649, 112
    %v733 = vpop.permute.xlu0 %732
    %734 = vrot.lane.b32.xlu0 %v651, 112
    %v735 = vpop.permute.xlu0 %734
    %736 = vrot.lane.b32.xlu0 %v646, 112
    %v737 = vpop.permute.xlu0 %736
    %738 = vrot.lane.b32.xlu0 %v648, 112
    %v739 = vpop.permute.xlu0 %738
    %740 = vrot.lane.b32.xlu0 %v650, 112
    %v741 = vpop.permute.xlu0 %740
    %742 = vrot.lane.b32.xlu0 %v652, 112
    %v743 = vpop.permute.xlu0 %742
    %vm744 = vcmp.lt.s32.totalorder %v670, 112
    %v745 = vsel %vm744, %v729, %v737
    %v746 = vsel %vm744, %v731, %v739
    %v747 = vsel %vm744, %v733, %v741
    %v748 = vsel %vm744, %v735, %v743
    %v749 = vsel %vm744, %v737, %v729
    %v750 = vsel %vm744, %v739, %v731
    %v751 = vsel %vm744, %v741, %v733
    %v752 = vsel %vm744, %v743, %v735
    %v753 = vlaneseq
    %v754 = vshrl.u32 %v753, 7
    %v755 = vsub.s32 2, %v754
    %v756 = vrot.slane %v612, %v755
    %v757 = vlaneseq
    %v758 = vshrl.u32 %v757, 7
    %v759 = vsub.s32 2, %v758
    %v760 = vrot.slane %v613, %v759
    %v761 = vmul.f32 %v745, %v756
    %v762 = vmul.f32 %v749, %v760
    %v763 = vmul.f32 %v746, %v756
    %v764 = vmul.f32 %v750, %v760
    %v765 = vmul.f32 %v747, %v756
    %v766 = vmul.f32 %v751, %v760
    %v767 = vmul.f32 %v748, %v756
    %v768 = vmul.f32 %v752, %v760
    %v769 = vadd.f32 %v720, %v761
    %v770 = vadd.f32 %v721, %v762
    %v771 = vadd.f32 %v722, %v763
    %v772 = vadd.f32 %v723, %v764
    %v773 = vadd.f32 %v724, %v765
    %v774 = vadd.f32 %v725, %v766
    %v775 = vadd.f32 %v726, %v767
    %v776 = vadd.f32 %v727, %v768
    %777 = vrot.lane.b32.xlu0 %v551, 16
    %v778 = vpop.permute.xlu0 %777
    %779 = vrot.lane.b32.xlu0 %v553, 16
    %v780 = vpop.permute.xlu0 %779
    %781 = vrot.lane.b32.xlu0 %v555, 16
    %v782 = vpop.permute.xlu0 %781
    %783 = vrot.lane.b32.xlu0 %v557, 16
    %v784 = vpop.permute.xlu0 %783
    %785 = vrot.lane.b32.xlu0 %v552, 16
    %v786 = vpop.permute.xlu0 %785
    %787 = vrot.lane.b32.xlu0 %v554, 16
    %v788 = vpop.permute.xlu0 %787
    %789 = vrot.lane.b32.xlu0 %v556, 16
    %v790 = vpop.permute.xlu0 %789
    %791 = vrot.lane.b32.xlu0 %v558, 16
    %v792 = vpop.permute.xlu0 %791
    %v793 = vsel %vm671, %v778, %v786
    %v794 = vsel %vm671, %v780, %v788
    %v795 = vsel %vm671, %v782, %v790
    %v796 = vsel %vm671, %v784, %v792
    %v797 = vsel %vm671, %v786, %v778
    %v798 = vsel %vm671, %v788, %v780
    %v799 = vsel %vm671, %v790, %v782
    %v800 = vsel %vm671, %v792, %v784
    %v801 = vlaneseq
    %v802 = vshrl.u32 %v801, 7
    %v803 = vsub.s32 3, %v802
    %v804 = vrot.slane %v612, %v803
    %v805 = vlaneseq
    %v806 = vshrl.u32 %v805, 7
    %v807 = vsub.s32 3, %v806
    %v808 = vrot.slane %v613, %v807
    %v809 = vmul.f32 %v797, %v804
    %v810 = vmul.f32 %v793, %v808
    %v811 = vmul.f32 %v798, %v804
    %v812 = vmul.f32 %v794, %v808
    %v813 = vmul.f32 %v799, %v804
    %v814 = vmul.f32 %v795, %v808
    %v815 = vmul.f32 %v800, %v804
    %v816 = vmul.f32 %v796, %v808
    %v817 = vadd.f32 %v769, %v809
    %v818 = vadd.f32 %v770, %v810
    %v819 = vadd.f32 %v771, %v811
    %v820 = vadd.f32 %v772, %v812
    %v821 = vadd.f32 %v773, %v813
    %v822 = vadd.f32 %v774, %v814
    %v823 = vadd.f32 %v775, %v815
    %v824 = vadd.f32 %v776, %v816
    %v825 = vlaneseq
    %v826 = vshrl.u32 %v825, 7
    %v827 = vsub.s32 4, %v826
    %v828 = vrot.slane %v612, %v827
    %v829 = vlaneseq
    %v830 = vshrl.u32 %v829, 7
    %v831 = vsub.s32 4, %v830
    %v832 = vrot.slane %v613, %v831
    %v833 = vmul.f32 %v551, %v828
    %v834 = vmul.f32 %v552, %v832
    %v835 = vmul.f32 %v553, %v828
    %v836 = vmul.f32 %v554, %v832
    %v837 = vmul.f32 %v555, %v828
    %v838 = vmul.f32 %v556, %v832
    %v839 = vmul.f32 %v557, %v828
    %v840 = vmul.f32 %v558, %v832
    %v841 = vadd.f32 %v817, %v833
    %v842 = vadd.f32 %v818, %v834
    %v843 = vadd.f32 %v819, %v835
    %v844 = vadd.f32 %v820, %v836
    %v845 = vadd.f32 %v821, %v837
    %v846 = vadd.f32 %v822, %v838
    %v847 = vadd.f32 %v823, %v839
    %v848 = vadd.f32 %v824, %v840
    %849 = vrot.lane.b32.xlu0 %v551, 112
    %v850 = vpop.permute.xlu0 %849
    %851 = vrot.lane.b32.xlu0 %v553, 112
    %v852 = vpop.permute.xlu0 %851
    %853 = vrot.lane.b32.xlu0 %v555, 112
    %v854 = vpop.permute.xlu0 %853
    %855 = vrot.lane.b32.xlu0 %v557, 112
    %v856 = vpop.permute.xlu0 %855
    %857 = vrot.lane.b32.xlu0 %v552, 112
    %v858 = vpop.permute.xlu0 %857
    %859 = vrot.lane.b32.xlu0 %v554, 112
    %v860 = vpop.permute.xlu0 %859
    %861 = vrot.lane.b32.xlu0 %v556, 112
    %v862 = vpop.permute.xlu0 %861
    %863 = vrot.lane.b32.xlu0 %v558, 112
    %v864 = vpop.permute.xlu0 %863
    %v865 = vsel %vm744, %v850, %v858
    %v866 = vsel %vm744, %v852, %v860
    %v867 = vsel %vm744, %v854, %v862
    %v868 = vsel %vm744, %v856, %v864
    %v869 = vsel %vm744, %v858, %v850
    %v870 = vsel %vm744, %v860, %v852
    %v871 = vsel %vm744, %v862, %v854
    %v872 = vsel %vm744, %v864, %v856
    %v873 = vlaneseq
    %v874 = vshrl.u32 %v873, 7
    %v875 = vsub.s32 5, %v874
    %v876 = vrot.slane %v612, %v875
    %v877 = vlaneseq
    %v878 = vshrl.u32 %v877, 7
    %v879 = vsub.s32 5, %v878
    %v880 = vrot.slane %v613, %v879
    %v881 = vmul.f32 %v865, %v876
    %v882 = vmul.f32 %v869, %v880
    %v883 = vmul.f32 %v866, %v876
    %v884 = vmul.f32 %v870, %v880
    %v885 = vmul.f32 %v867, %v876
    %v886 = vmul.f32 %v871, %v880
    %v887 = vmul.f32 %v868, %v876
    %v888 = vmul.f32 %v872, %v880
    %v889 = vadd.f32 %v841, %v881
    %v890 = vadd.f32 %v842, %v882
    %v891 = vadd.f32 %v843, %v883
    %v892 = vadd.f32 %v844, %v884
    %v893 = vadd.f32 %v845, %v885
    %v894 = vadd.f32 %v846, %v886
    %v895 = vadd.f32 %v847, %v887
    %v896 = vadd.f32 %v848, %v888
    %v897 = vrot.slane %v551, 1
    %v898 = vrot.slane %v552, 1
    %v899 = vrot.slane %v553, 1
    %v900 = vrot.slane %v554, 1
    %v901 = vrot.slane %v555, 1
    %v902 = vrot.slane %v556, 1
    %v903 = vrot.slane %v557, 1
    %v904 = vrot.slane %v558, 1
    %vm905 = vcmp.lt.s32.totalorder %v560, 7
    %v906 = vsel %vm905, %v901, %v903
    %v907 = vsel %vm905, %v902, %v904
    %v908 = vsel %vm905, %v899, %v901
    %v909 = vsel %vm905, %v900, %v902
    %v910 = vsel %vm905, %v897, %v899
    %v911 = vsel %vm905, %v898, %v900
    %v912 = vsel %vm905, %v903, %v897
    %v913 = vsel %vm905, %v904, %v898
    %vm914 = vcmp.lt.s32.totalorder %v608, 15
    %vm915 = vcmp.lt.s32.totalorder %v609, 15
    %vm916 = vcmp.lt.s32.totalorder %v610, 15
    %vm917 = vcmp.lt.s32.totalorder %v611, 15
    %v918 = vsel %vm914, 1, 0
    %v919 = vsel %vm915, 1, 0
    %v920 = vsel %vm916, 1, 0
    %v921 = vsel %vm917, 1, 0
    %vm922 = vcmp.eq.s32.totalorder %v918, 1
    %vm923 = vcmp.eq.s32.totalorder %v919, 1
    %vm924 = vcmp.eq.s32.totalorder %v920, 1
    %vm925 = vcmp.eq.s32.totalorder %v921, 1
    %v926 = vsel %vm922, %v910, 0.0
    %v927 = vsel %vm922, %v911, 0.0
    %v928 = vsel %vm923, %v908, 0.0
    %v929 = vsel %vm923, %v909, 0.0
    %v930 = vsel %vm924, %v906, 0.0
    %v931 = vsel %vm924, %v907, 0.0
    %v932 = vsel %vm925, %v912, 0.0
    %v933 = vsel %vm925, %v913, 0.0
    %934 = vrot.lane.b32.xlu0 %v926, 16
    %v935 = vpop.permute.xlu0 %934
    %936 = vrot.lane.b32.xlu0 %v928, 16
    %v937 = vpop.permute.xlu0 %936
    %938 = vrot.lane.b32.xlu0 %v930, 16
    %v939 = vpop.permute.xlu0 %938
    %940 = vrot.lane.b32.xlu0 %v932, 16
    %v941 = vpop.permute.xlu0 %940
    %942 = vrot.lane.b32.xlu0 %v927, 16
    %v943 = vpop.permute.xlu0 %942
    %944 = vrot.lane.b32.xlu0 %v929, 16
    %v945 = vpop.permute.xlu0 %944
    %946 = vrot.lane.b32.xlu0 %v931, 16
    %v947 = vpop.permute.xlu0 %946
    %948 = vrot.lane.b32.xlu0 %v933, 16
    %v949 = vpop.permute.xlu0 %948
    %v950 = vsel %vm671, %v935, %v943
    %v951 = vsel %vm671, %v937, %v945
    %v952 = vsel %vm671, %v939, %v947
    %v953 = vsel %vm671, %v941, %v949
    %v954 = vsel %vm671, %v943, %v935
    %v955 = vsel %vm671, %v945, %v937
    %v956 = vsel %vm671, %v947, %v939
    %v957 = vsel %vm671, %v949, %v941
    %v958 = vlaneseq
    %v959 = vshrl.u32 %v958, 7
    %v960 = vsub.s32 6, %v959
    %v961 = vrot.slane %v612, %v960
    %v962 = vlaneseq
    %v963 = vshrl.u32 %v962, 7
    %v964 = vsub.s32 6, %v963
    %v965 = vrot.slane %v613, %v964
    %v966 = vmul.f32 %v954, %v961
    %v967 = vmul.f32 %v950, %v965
    %v968 = vmul.f32 %v955, %v961
    %v969 = vmul.f32 %v951, %v965
    %v970 = vmul.f32 %v956, %v961
    %v971 = vmul.f32 %v952, %v965
    %v972 = vmul.f32 %v957, %v961
    %v973 = vmul.f32 %v953, %v965
    %v974 = vadd.f32 %v889, %v966
    %v975 = vadd.f32 %v890, %v967
    %v976 = vadd.f32 %v891, %v968
    %v977 = vadd.f32 %v892, %v969
    %v978 = vadd.f32 %v893, %v970
    %v979 = vadd.f32 %v894, %v971
    %v980 = vadd.f32 %v895, %v972
    %v981 = vadd.f32 %v896, %v973
    %v982 = vlaneseq
    %v983 = vshrl.u32 %v982, 7
    %v984 = vsub.s32 7, %v983
    %v985 = vrot.slane %v612, %v984
    %v986 = vlaneseq
    %v987 = vshrl.u32 %v986, 7
    %v988 = vsub.s32 7, %v987
    %v989 = vrot.slane %v613, %v988
    %v990 = vmul.f32 %v926, %v985
    %v991 = vmul.f32 %v927, %v989
    %v992 = vmul.f32 %v928, %v985
    %v993 = vmul.f32 %v929, %v989
    %v994 = vmul.f32 %v930, %v985
    %v995 = vmul.f32 %v931, %v989
    %v996 = vmul.f32 %v932, %v985
    %v997 = vmul.f32 %v933, %v989
    %v998 = vadd.f32 %v974, %v990
    %v999 = vadd.f32 %v975, %v991
    %v1000 = vadd.f32 %v976, %v992
    %v1001 = vadd.f32 %v977, %v993
    %v1002 = vadd.f32 %v978, %v994
    %v1003 = vadd.f32 %v979, %v995
    %v1004 = vadd.f32 %v980, %v996
    %v1005 = vadd.f32 %v981, %v997
    %1006 = vrot.lane.b32.xlu0 %v926, 112
    %v1007 = vpop.permute.xlu0 %1006
    %1008 = vrot.lane.b32.xlu0 %v928, 112
    %v1009 = vpop.permute.xlu0 %1008
    %1010 = vrot.lane.b32.xlu0 %v930, 112
    %v1011 = vpop.permute.xlu0 %1010
    %1012 = vrot.lane.b32.xlu0 %v932, 112
    %v1013 = vpop.permute.xlu0 %1012
    %1014 = vrot.lane.b32.xlu0 %v927, 112
    %v1015 = vpop.permute.xlu0 %1014
    %1016 = vrot.lane.b32.xlu0 %v929, 112
    %v1017 = vpop.permute.xlu0 %1016
    %1018 = vrot.lane.b32.xlu0 %v931, 112
    %v1019 = vpop.permute.xlu0 %1018
    %1020 = vrot.lane.b32.xlu0 %v933, 112
    %v1021 = vpop.permute.xlu0 %1020
    %v1022 = vsel %vm744, %v1007, %v1015
    %v1023 = vsel %vm744, %v1009, %v1017
    %v1024 = vsel %vm744, %v1011, %v1019
    %v1025 = vsel %vm744, %v1013, %v1021
    %v1026 = vsel %vm744, %v1015, %v1007
    %v1027 = vsel %vm744, %v1017, %v1009
    %v1028 = vsel %vm744, %v1019, %v1011
    %v1029 = vsel %vm744, %v1021, %v1013
    %v1030 = vlaneseq
    %v1031 = vshrl.u32 %v1030, 7
    %v1032 = vsub.s32 0, %v1031
    %v1033 = vrot.slane %v614, %v1032
    %v1034 = vlaneseq
    %v1035 = vshrl.u32 %v1034, 7
    %v1036 = vsub.s32 0, %v1035
    %v1037 = vrot.slane %v615, %v1036
    %v1038 = vmul.f32 %v1022, %v1033
    %v1039 = vmul.f32 %v1026, %v1037
    %v1040 = vmul.f32 %v1023, %v1033
    %v1041 = vmul.f32 %v1027, %v1037
    %v1042 = vmul.f32 %v1024, %v1033
    %v1043 = vmul.f32 %v1028, %v1037
    %v1044 = vmul.f32 %v1025, %v1033
    %v1045 = vmul.f32 %v1029, %v1037
    %v1046 = vadd.f32 %v998, %v1038
    %v1047 = vadd.f32 %v999, %v1039
    %v1048 = vadd.f32 %v1000, %v1040
    %v1049 = vadd.f32 %v1001, %v1041
    %v1050 = vadd.f32 %v1002, %v1042
    %v1051 = vadd.f32 %v1003, %v1043
    %v1052 = vadd.f32 %v1004, %v1044
    %v1053 = vadd.f32 %v1005, %v1045
    %v1054 = vld [vmem:[%s5] sm:$0x1]
    %v1055 = vld [vmem:[%s6] sm:$0x1]
    %v1056 = vld [vmem:[%s16] sm:$0xff]
    %v1057 = vld [vmem:[%s16 + $0x8] sm:$0xff]
    %v1058 = vld [vmem:[%s16 + $0x10] sm:$0xff]
    %v1059 = vld [vmem:[%s16 + $0x18] sm:$0xff]
    %v1060 = vld [vmem:[%s16 + $0x20] sm:$0xff]
    %v1061 = vld [vmem:[%s16 + $0x28] sm:$0xff]
    %v1062 = vld [vmem:[%s16 + $0x30] sm:$0xff]
    %v1063 = vld [vmem:[%s16 + $0x38] sm:$0xff]
    %v1064 = vld [vmem:[%s16 + $0x40] sm:$0xff]
    %v1065 = vld [vmem:[%s16 + $0x48] sm:$0xff]
    %v1066 = vld [vmem:[%s16 + $0x50] sm:$0xff]
    %v1067 = vld [vmem:[%s16 + $0x58] sm:$0xff]
    %v1068 = vld [vmem:[%s16 + $0x60] sm:$0xff]
    %v1069 = vld [vmem:[%s16 + $0x68] sm:$0xff]
    %v1070 = vld [vmem:[%s16 + $0x70] sm:$0xff]
    %v1071 = vld [vmem:[%s16 + $0x78] sm:$0xff]
    %v1072 = vld [vmem:[%s16 + $0x80] sm:$0xff]
    %v1073 = vld [vmem:[%s16 + $0x88] sm:$0xff]
    %v1074 = vld [vmem:[%s16 + $0x90] sm:$0xff]
    %v1075 = vld [vmem:[%s16 + $0x98] sm:$0xff]
    %v1076 = vld [vmem:[%s16 + $0xa0] sm:$0xff]
    %v1077 = vld [vmem:[%s16 + $0xa8] sm:$0xff]
    %v1078 = vld [vmem:[%s16 + $0xb0] sm:$0xff]
    %v1079 = vld [vmem:[%s16 + $0xb8] sm:$0xff]
    %v1080 = vld [vmem:[%s16 + $0xc0] sm:$0xff]
    %v1081 = vld [vmem:[%s16 + $0xc8] sm:$0xff]
    %v1082 = vld [vmem:[%s16 + $0xd0] sm:$0xff]
    %v1083 = vld [vmem:[%s16 + $0xd8] sm:$0xff]
    %v1084 = vld [vmem:[%s16 + $0xe0] sm:$0xff]
    %v1085 = vld [vmem:[%s16 + $0xe8] sm:$0xff]
    %v1086 = vld [vmem:[%s16 + $0xf0] sm:$0xff]
    %v1087 = vld [vmem:[%s16 + $0xf8] sm:$0xff]
    %v1088 = vld [vmem:[%s17] sm:$0xff]
    %v1089 = vld [vmem:[%s17 + $0x8] sm:$0xff]
    %v1090 = vld [vmem:[%s17 + $0x10] sm:$0xff]
    %v1091 = vld [vmem:[%s17 + $0x18] sm:$0xff]
    %v1092 = vadd.f32 %v1046, %v1048
    %v1093 = vadd.f32 %v1092, %v1050
    %v1094 = vadd.f32 %v1093, %v1052
    %v1095 = vrot.slane %v1094, 4
    %v1096 = vadd.f32 %v1094, %v1095
    %v1097 = vrot.slane %v1096, 2
    %v1098 = vadd.f32 %v1096, %v1097
    %v1099 = vrot.slane %v1098, 1
    %v1100 = vadd.f32 %v1098, %v1099
    %v1101 = vadd.f32 %v1047, %v1049
    %v1102 = vadd.f32 %v1101, %v1051
    %v1103 = vadd.f32 %v1102, %v1053
    %v1104 = vrot.slane %v1103, 4
    %v1105 = vadd.f32 %v1103, %v1104
    %v1106 = vrot.slane %v1105, 2
    %v1107 = vadd.f32 %v1105, %v1106
    %v1108 = vrot.slane %v1107, 1
    %v1109 = vadd.f32 %v1107, %v1108
    %v1110 = vmul.f32 %v1046, %v1046
    %v1111 = vmul.f32 %v1047, %v1047
    %v1112 = vmul.f32 %v1048, %v1048
    %v1113 = vmul.f32 %v1049, %v1049
    %v1114 = vmul.f32 %v1050, %v1050
    %v1115 = vmul.f32 %v1051, %v1051
    %v1116 = vmul.f32 %v1052, %v1052
    %v1117 = vmul.f32 %v1053, %v1053
    %v1118 = vadd.f32 %v1110, %v1112
    %v1119 = vadd.f32 %v1118, %v1114
    %v1120 = vadd.f32 %v1119, %v1116
    %v1121 = vrot.slane %v1120, 4
    %v1122 = vadd.f32 %v1120, %v1121
    %v1123 = vrot.slane %v1122, 2
    %v1124 = vadd.f32 %v1122, %v1123
    %v1125 = vrot.slane %v1124, 1
    %v1126 = vadd.f32 %v1124, %v1125
    %v1127 = vadd.f32 %v1111, %v1113
    %v1128 = vadd.f32 %v1127, %v1115
    %v1129 = vadd.f32 %v1128, %v1117
    %v1130 = vrot.slane %v1129, 4
    %v1131 = vadd.f32 %v1129, %v1130
    %v1132 = vrot.slane %v1131, 2
    %v1133 = vadd.f32 %v1131, %v1132
    %v1134 = vrot.slane %v1133, 1
    %v1135 = vadd.f32 %v1133, %v1134
    %v1136 = vsel %vm304, %v1100, %v1126
    %v1137 = vsel %vm304, %v1109, %v1135
    %1138 = vmatprep.subr.mxu0 0.0
    %1139 = vmatpush1.msra.mxu0 %v1071
    %1140 = vmatprep.subr.mxu0 0.0
    %1141 = vmatpush1.msra.mxu0 %v1070
    %1142 = vmatprep.subr.mxu0 0.0
    %1143 = vmatpush1.msra.mxu0 %v1069
    %1144 = vmatprep.subr.mxu0 0.0
    %1145 = vmatpush1.msra.mxu0 %v1068
    %1146 = vmatprep.subr.mxu0 0.0
    %1147 = vmatpush1.msra.mxu0 %v1067
    %1148 = vmatprep.subr.mxu0 0.0
    %1149 = vmatpush1.msra.mxu0 %v1066
    %1150 = vmatprep.subr.mxu0 0.0
    %1151 = vmatpush1.msra.mxu0 %v1065
    %1152 = vmatprep.subr.mxu0 0.0
    %1153 = vmatpush1.msra.mxu0 %v1064
    %1154 = vmatprep.subr.mxu0 0.0
    %1155 = vmatpush1.msra.mxu0 %v1063
    %1156 = vmatprep.subr.mxu0 0.0
    %1157 = vmatpush1.msra.mxu0 %v1062
    %1158 = vmatprep.subr.mxu0 0.0
    %1159 = vmatpush1.msra.mxu0 %v1061
    %1160 = vmatprep.subr.mxu0 0.0
    %1161 = vmatpush1.msra.mxu0 %v1060
    %1162 = vmatprep.subr.mxu0 0.0
    %1163 = vmatpush1.msra.mxu0 %v1059
    %1164 = vmatprep.subr.mxu0 0.0
    %1165 = vmatpush1.msra.mxu0 %v1058
    %1166 = vmatprep.subr.mxu0 0.0
    %1167 = vmatpush1.msra.mxu0 %v1057
    %1168 = vmatprep.subr.mxu0 0.0
    %1169 = vmatpush1.msra.mxu0 %v1056
    %1170 = vmatprep.subr.mxu0 0.0
    %1171 = vmatpush2.msra.mxu0 %v1087
    %1172 = vmatprep.subr.mxu0 0.0
    %1173 = vmatpush2.msra.mxu0 %v1086
    %1174 = vmatprep.subr.mxu0 0.0
    %1175 = vmatpush2.msra.mxu0 %v1085
    %1176 = vmatprep.subr.mxu0 0.0
    %1177 = vmatpush2.msra.mxu0 %v1084
    %1178 = vmatprep.subr.mxu0 0.0
    %1179 = vmatpush2.msra.mxu0 %v1083
    %1180 = vmatprep.subr.mxu0 0.0
    %1181 = vmatpush2.msra.mxu0 %v1082
    %1182 = vmatprep.subr.mxu0 0.0
    %1183 = vmatpush2.msra.mxu0 %v1081
    %1184 = vmatprep.subr.mxu0 0.0
    %1185 = vmatpush2.msra.mxu0 %v1080
    %1186 = vmatprep.subr.mxu0 0.0
    %1187 = vmatpush2.msra.mxu0 %v1079
    %1188 = vmatprep.subr.mxu0 0.0
    %1189 = vmatpush2.msra.mxu0 %v1078
    %1190 = vmatprep.subr.mxu0 0.0
    %1191 = vmatpush2.msra.mxu0 %v1077
    %1192 = vmatprep.subr.mxu0 0.0
    %1193 = vmatpush2.msra.mxu0 %v1076
    %1194 = vmatprep.subr.mxu0 0.0
    %1195 = vmatpush2.msra.mxu0 %v1075
    %1196 = vmatprep.subr.mxu0 0.0
    %1197 = vmatpush2.msra.mxu0 %v1074
    %1198 = vmatprep.subr.mxu0 0.0
    %1199 = vmatpush2.msra.mxu0 %v1073
    %1200 = vmatprep.subr.mxu0 0.0
    %1201 = vmatpush2.msra.mxu0 %v1072
    %1202 = vmatprep.mubr.f32.mxu0 %v1137
    %1203 = vmatmul.mubr.f32.gmra.mxu0 %v1136
    %v1204 = vpop.f32.mrf.mxu0
    %v1205 = vadd.f32 0.0, %v1204
    %v1206 = vpop.f32.mrf.mxu0
    %1207 = vdwg.mxu0
    %v1208 = vmul.f32 %v1205, 0.001953125
    %v1209 = vmul.f32 %v1208, %v1208
    %v1211 = vrot.slane %v1209, 7
    %v1213 = vsub.f32 %v1208, %v1211
    %v1214 = vadd.f32 %v1213, 1e-05
    %v1215 = vrsqrt.pop %v1214
    %v1218 = vunpack.c.l.s4 1966171168
    %v1219 = vunpack.c.0.s8 %v1218
    %v1220 = vlaneseq
    %v1221 = vshrl.u32 %v1220, 7
    %v1222 = vsub.s32 %v1219, %v1221
    %v1223 = vrot.slane %v1215, %v1222
    %v1224 = vcombine.high %v1223, %v1223
    %v1226 = vunpack.c.l.s4 1966171168
    %v1227 = vunpack.c.0.s8 %v1226
    %v1228 = vlaneseq
    %v1229 = vshrl.u32 %v1228, 7
    %v1230 = vsub.s32 %v1227, %v1229
    %v1231 = vrot.slane %v1224, %v1230
    %v1233 = vmul.f32 %v1054, %v1231
    %v1234 = vmul.f32 %v1208, %v1233
    %v1235 = vsub.f32 %v1055, %v1234
    %v1237 = vlaneseq
    %v1238 = vshrl.u32 %v1237, 7
    %v1239 = vsub.s32 0, %v1238
    %v1240 = vrot.slane %v1235, %v1239
    %v1242 = vsel %vm304, %v1233, %v1240
    %v1244 = vsel %vm412, %v1242, 0
    %1246 = vmatprep.subr.mxu0 0.0
    %1247 = vmatpush1.msra.mxu0 0.0
    %1248 = vmatprep.subr.mxu0 0.0
    %1249 = vmatpush1.msra.mxu0 0.0
    %1250 = vmatprep.subr.mxu0 0.0
    %1251 = vmatpush1.msra.mxu0 0.0
    %1252 = vmatprep.subr.mxu0 0.0
    %1253 = vmatpush1.msra.mxu0 0.0
    %1254 = vmatprep.subr.mxu0 0.0
    %1255 = vmatpush1.msra.mxu0 0.0
    %1256 = vmatprep.subr.mxu0 0.0
    %1257 = vmatpush1.msra.mxu0 0.0
    %1258 = vmatprep.subr.mxu0 0.0
    %1259 = vmatpush1.msra.mxu0 0.0
    %1260 = vmatprep.subr.mxu0 0.0
    %1261 = vmatpush1.msra.mxu0 0.0
    %1262 = vmatprep.subr.mxu0 0.0
    %1263 = vmatpush1.msra.mxu0 0.0
    %1264 = vmatprep.subr.mxu0 0.0
    %1265 = vmatpush1.msra.mxu0 0.0
    %1266 = vmatprep.subr.mxu0 0.0
    %1267 = vmatpush1.msra.mxu0 0.0
    %1268 = vmatprep.subr.mxu0 0.0
    %1269 = vmatpush1.msra.mxu0 0.0
    %1270 = vmatprep.subr.mxu0 0.0
    %1271 = vmatpush1.msra.mxu0 0.0
    %1272 = vmatprep.subr.mxu0 0.0
    %1273 = vmatpush1.msra.mxu0 0.0
    %1274 = vmatprep.subr.mxu0 %v1091
    %1275 = vmatpush1.msra.mxu0 %v1090
    %1276 = vmatprep.subr.mxu0 %v1089
    %1277 = vmatpush1.msra.mxu0 %v1088
    %1278 = vmatprep.subr.mxu0 0.0
    %1279 = vmatpush2.msra.mxu0 0.0
    %1280 = vmatprep.subr.mxu0 0.0
    %1281 = vmatpush2.msra.mxu0 0.0
    %1282 = vmatprep.subr.mxu0 0.0
    %1283 = vmatpush2.msra.mxu0 0.0
    %1284 = vmatprep.subr.mxu0 0.0
    %1285 = vmatpush2.msra.mxu0 0.0
    %1286 = vmatprep.subr.mxu0 0.0
    %1287 = vmatpush2.msra.mxu0 0.0
    %1288 = vmatprep.subr.mxu0 0.0
    %1289 = vmatpush2.msra.mxu0 0.0
    %1290 = vmatprep.subr.mxu0 0.0
    %1291 = vmatpush2.msra.mxu0 0.0
    %1292 = vmatprep.subr.mxu0 0.0
    %1293 = vmatpush2.msra.mxu0 0.0
    %1294 = vmatprep.subr.mxu0 0.0
    %1295 = vmatpush2.msra.mxu0 0.0
    %1296 = vmatprep.subr.mxu0 0.0
    %1297 = vmatpush2.msra.mxu0 0.0
    %1298 = vmatprep.subr.mxu0 0.0
    %1299 = vmatpush2.msra.mxu0 0.0
    %1300 = vmatprep.subr.mxu0 0.0
    %1301 = vmatpush2.msra.mxu0 0.0
    %1302 = vmatprep.subr.mxu0 0.0
    %1303 = vmatpush2.msra.mxu0 0.0
    %1304 = vmatprep.subr.mxu0 0.0
    %1305 = vmatpush2.msra.mxu0 0.0
    %1306 = vmatprep.subr.mxu0 0.0
    %1307 = vmatpush2.msra.mxu0 0.0
    %1308 = vmatprep.subr.mxu0 0.0
    %1309 = vmatpush2.msra.mxu0 0.0
    %1310 = vmatprep.mubr.f32.mxu0 0.0
    %1311 = vmatmul.mubr.f32.gmra.mxu0 %v1244
    %v1312 = vpop.f32.mrf.mxu0
    %v1313 = vadd.f32 0.0, %v1312
    %v1314 = vpop.f32.mrf.mxu0
    %v1315 = vadd.f32 0.0, %v1314
    %1316 = vdwg.mxu0
    %v1317 = vlaneseq
    %v1318 = vshrl.u32 %v1317, 7
    %v1319 = vsub.s32 0, %v1318
    %v1320 = vrot.slane %v1313, %v1319
    %v1321 = vlaneseq
    %v1322 = vshrl.u32 %v1321, 7
    %v1323 = vsub.s32 0, %v1322
    %v1324 = vrot.slane %v1315, %v1323
    %v1325 = vmul.f32 %v1046, %v1320
    %v1326 = vmul.f32 %v1047, %v1324
    %v1327 = vmul.f32 %v1048, %v1320
    %v1328 = vmul.f32 %v1049, %v1324
    %v1329 = vmul.f32 %v1050, %v1320
    %v1330 = vmul.f32 %v1051, %v1324
    %v1331 = vmul.f32 %v1052, %v1320
    %v1332 = vmul.f32 %v1053, %v1324
    %v1333 = vlaneseq
    %v1334 = vshrl.u32 %v1333, 7
    %v1335 = vsub.s32 1, %v1334
    %v1336 = vrot.slane %v1313, %v1335
    %v1337 = vlaneseq
    %v1338 = vshrl.u32 %v1337, 7
    %v1339 = vsub.s32 1, %v1338
    %v1340 = vrot.slane %v1315, %v1339
    %v1341 = vadd.f32 %v1325, %v1336
    %v1342 = vadd.f32 %v1326, %v1340
    %v1343 = vadd.f32 %v1327, %v1336
    %v1344 = vadd.f32 %v1328, %v1340
    %v1345 = vadd.f32 %v1329, %v1336
    %v1346 = vadd.f32 %v1330, %v1340
    %v1347 = vadd.f32 %v1331, %v1336
    %v1348 = vadd.f32 %v1332, %v1340
    %v1349 = vadd.f32 %v1341, 3.0
    %v1350 = vadd.f32 %v1342, 3.0
    %v1351 = vadd.f32 %v1343, 3.0
    %v1352 = vadd.f32 %v1344, 3.0
    %v1353 = vadd.f32 %v1345, 3.0
    %v1354 = vadd.f32 %v1346, 3.0
    %v1355 = vadd.f32 %v1347, 3.0
    %v1356 = vadd.f32 %v1348, 3.0
    %v1357 = vmax.f32 %v1349, 0.0
    %v1358 = vmax.f32 %v1350, 0.0
    %v1359 = vmax.f32 %v1351, 0.0
    %v1360 = vmax.f32 %v1352, 0.0
    %v1361 = vmax.f32 %v1353, 0.0
    %v1362 = vmax.f32 %v1354, 0.0
    %v1363 = vmax.f32 %v1355, 0.0
    %v1364 = vmax.f32 %v1356, 0.0
    %v1365 = vmin.f32 %v1357, 6.0
    %v1366 = vmin.f32 %v1358, 6.0
    %v1367 = vmin.f32 %v1359, 6.0
    %v1368 = vmin.f32 %v1360, 6.0
    %v1369 = vmin.f32 %v1361, 6.0
    %v1370 = vmin.f32 %v1362, 6.0
    %v1371 = vmin.f32 %v1363, 6.0
    %v1372 = vmin.f32 %v1364, 6.0
    %v1373 = vmul.f32 %v1341, %v1365
    %v1374 = vmul.f32 %v1342, %v1366
    %v1375 = vmul.f32 %v1343, %v1367
    %v1376 = vmul.f32 %v1344, %v1368
    %v1377 = vmul.f32 %v1345, %v1369
    %v1378 = vmul.f32 %v1346, %v1370
    %v1379 = vmul.f32 %v1347, %v1371
    %v1380 = vmul.f32 %v1348, %v1372
    %v1381 = vmul.f32 %v1373, 0.16666667
    %v1382 = vmul.f32 %v1374, 0.16666667
    %v1383 = vmul.f32 %v1375, 0.16666667
    %v1384 = vmul.f32 %v1376, 0.16666667
    %v1385 = vmul.f32 %v1377, 0.16666667
    %v1386 = vmul.f32 %v1378, 0.16666667
    %v1387 = vmul.f32 %v1379, 0.16666667
    %v1388 = vmul.f32 %v1380, 0.16666667
    %v1389 = vadd.f32 %v1381, %v1383
    %v1390 = vrot.slane %v1389, 4
    %v1391 = vadd.f32 %v1389, %v1390
    %v1392 = vrot.slane %v1391, 2
    %v1393 = vadd.f32 %v1391, %v1392
    %v1394 = vrot.slane %v1393, 1
    %v1395 = vadd.f32 %v1393, %v1394
    %v1396 = vadd.f32 %v1382, %v1384
    %v1397 = vrot.slane %v1396, 4
    %v1398 = vadd.f32 %v1396, %v1397
    %v1399 = vrot.slane %v1398, 2
    %v1400 = vadd.f32 %v1398, %v1399
    %v1401 = vrot.slane %v1400, 1
    %v1402 = vadd.f32 %v1400, %v1401
    %v1403 = vadd.f32 %v1385, %v1387
    %v1404 = vrot.slane %v1403, 4
    %v1405 = vadd.f32 %v1403, %v1404
    %v1406 = vrot.slane %v1405, 2
    %v1407 = vadd.f32 %v1405, %v1406
    %v1408 = vrot.slane %v1407, 1
    %v1409 = vadd.f32 %v1407, %v1408
    %v1410 = vadd.f32 %v1386, %v1388
    %v1411 = vrot.slane %v1410, 4
    %v1412 = vadd.f32 %v1410, %v1411
    %v1413 = vrot.slane %v1412, 2
    %v1414 = vadd.f32 %v1412, %v1413
    %v1415 = vrot.slane %v1414, 1
    %v1416 = vadd.f32 %v1414, %v1415
    %vm1421 = vcmask 1041409
    %v1422 = vsel %vm1421, %v1409, %v1395
    %v1423 = vsel %vm1421, %v1416, %v1402
    %1426 = vmatprep.subr.mxu0 0.0
    %1427 = vmatpush1.msra.mxu0 %v1071
    %1428 = vmatprep.subr.mxu0 0.0
    %1429 = vmatpush1.msra.mxu0 %v1070
    %1430 = vmatprep.subr.mxu0 0.0
    %1431 = vmatpush1.msra.mxu0 %v1069
    %1432 = vmatprep.subr.mxu0 0.0
    %1433 = vmatpush1.msra.mxu0 %v1068
    %1434 = vmatprep.subr.mxu0 0.0
    %1435 = vmatpush1.msra.mxu0 %v1067
    %1436 = vmatprep.subr.mxu0 0.0
    %1437 = vmatpush1.msra.mxu0 %v1066
    %1438 = vmatprep.subr.mxu0 0.0
    %1439 = vmatpush1.msra.mxu0 %v1065
    %1440 = vmatprep.subr.mxu0 0.0
    %1441 = vmatpush1.msra.mxu0 %v1064
    %1442 = vmatprep.subr.mxu0 0.0
    %1443 = vmatpush1.msra.mxu0 %v1063
    %1444 = vmatprep.subr.mxu0 0.0
    %1445 = vmatpush1.msra.mxu0 %v1062
    %1446 = vmatprep.subr.mxu0 0.0
    %1447 = vmatpush1.msra.mxu0 %v1061
    %1448 = vmatprep.subr.mxu0 0.0
    %1449 = vmatpush1.msra.mxu0 %v1060
    %1450 = vmatprep.subr.mxu0 0.0
    %1451 = vmatpush1.msra.mxu0 %v1059
    %1452 = vmatprep.subr.mxu0 0.0
    %1453 = vmatpush1.msra.mxu0 %v1058
    %1454 = vmatprep.subr.mxu0 0.0
    %1455 = vmatpush1.msra.mxu0 %v1057
    %1456 = vmatprep.subr.mxu0 0.0
    %1457 = vmatpush1.msra.mxu0 %v1056
    %1458 = vmatprep.subr.mxu0 0.0
    %1459 = vmatpush2.msra.mxu0 %v1087
    %1460 = vmatprep.subr.mxu0 0.0
    %1461 = vmatpush2.msra.mxu0 %v1086
    %1462 = vmatprep.subr.mxu0 0.0
    %1463 = vmatpush2.msra.mxu0 %v1085
    %1464 = vmatprep.subr.mxu0 0.0
    %1465 = vmatpush2.msra.mxu0 %v1084
    %1466 = vmatprep.subr.mxu0 0.0
    %1467 = vmatpush2.msra.mxu0 %v1083
    %1468 = vmatprep.subr.mxu0 0.0
    %1469 = vmatpush2.msra.mxu0 %v1082
    %1470 = vmatprep.subr.mxu0 0.0
    %1471 = vmatpush2.msra.mxu0 %v1081
    %1472 = vmatprep.subr.mxu0 0.0
    %1473 = vmatpush2.msra.mxu0 %v1080
    %1474 = vmatprep.subr.mxu0 0.0
    %1475 = vmatpush2.msra.mxu0 %v1079
    %1476 = vmatprep.subr.mxu0 0.0
    %1477 = vmatpush2.msra.mxu0 %v1078
    %1478 = vmatprep.subr.mxu0 0.0
    %1479 = vmatpush2.msra.mxu0 %v1077
    %1480 = vmatprep.subr.mxu0 0.0
    %1481 = vmatpush2.msra.mxu0 %v1076
    %1482 = vmatprep.subr.mxu0 0.0
    %1483 = vmatpush2.msra.mxu0 %v1075
    %1484 = vmatprep.subr.mxu0 0.0
    %1485 = vmatpush2.msra.mxu0 %v1074
    %1486 = vmatprep.subr.mxu0 0.0
    %1487 = vmatpush2.msra.mxu0 %v1073
    %1488 = vmatprep.subr.mxu0 0.0
    %1489 = vmatpush2.msra.mxu0 %v1072
    %1490 = vmatprep.mubr.f32.mxu0 %v1423
    %1491 = vmatmul.mubr.f32.gmra.mxu0 %v1422
    %v1492 = vpop.f32.mrf.mxu0
    %v1493 = vadd.f32 0.0, %v1492
    %v1494 = vpop.f32.mrf.mxu0
    %1495 = vdwg.mxu0
    %v1496 = vmul.f32 %v1493, 0.00390625
    %v1497 = vld [vmem:[%s7] sm:$0xff]
    %v1498 = vld [vmem:[%s7 + $0x8] sm:$0xff]
    %v1499 = vld [vmem:[%s8] sm:$0x1]
    %v1501 = vlaneseq
    %v1502 = vshrl.u32 %v1501, 7
    %v1503 = vsub.s32 0, %v1502
    %v1504 = vrot.slane %v1499, %v1503
    %v1507 = vsel %vm412, %v1496, 0
    %1509 = vmatprep.subr.mxu0 0.0
    %1510 = vmatpush1.msra.mxu0 0.0
    %1511 = vmatprep.subr.mxu0 0.0
    %1512 = vmatpush1.msra.mxu0 0.0
    %1513 = vmatprep.subr.mxu0 0.0
    %1514 = vmatpush1.msra.mxu0 0.0
    %1515 = vmatprep.subr.mxu0 0.0
    %1516 = vmatpush1.msra.mxu0 0.0
    %1517 = vmatprep.subr.mxu0 0.0
    %1518 = vmatpush1.msra.mxu0 0.0
    %1519 = vmatprep.subr.mxu0 0.0
    %1520 = vmatpush1.msra.mxu0 0.0
    %1521 = vmatprep.subr.mxu0 0.0
    %1522 = vmatpush1.msra.mxu0 0.0
    %1523 = vmatprep.subr.mxu0 0.0
    %1524 = vmatpush1.msra.mxu0 0.0
    %1525 = vmatprep.subr.mxu0 0.0
    %1526 = vmatpush1.msra.mxu0 0.0
    %1527 = vmatprep.subr.mxu0 0.0
    %1528 = vmatpush1.msra.mxu0 0.0
    %1529 = vmatprep.subr.mxu0 0.0
    %1530 = vmatpush1.msra.mxu0 0.0
    %1531 = vmatprep.subr.mxu0 0.0
    %1532 = vmatpush1.msra.mxu0 0.0
    %1533 = vmatprep.subr.mxu0 0.0
    %1534 = vmatpush1.msra.mxu0 0.0
    %1535 = vmatprep.subr.mxu0 0.0
    %1536 = vmatpush1.msra.mxu0 0.0
    %1537 = vmatprep.subr.mxu0 0.0
    %1538 = vmatpush1.msra.mxu0 %v1498
    %1539 = vmatprep.subr.mxu0 0.0
    %1540 = vmatpush1.msra.mxu0 %v1497
    %1541 = vmatprep.subr.mxu0 0.0
    %1542 = vmatpush2.msra.mxu0 0.0
    %1543 = vmatprep.subr.mxu0 0.0
    %1544 = vmatpush2.msra.mxu0 0.0
    %1545 = vmatprep.subr.mxu0 0.0
    %1546 = vmatpush2.msra.mxu0 0.0
    %1547 = vmatprep.subr.mxu0 0.0
    %1548 = vmatpush2.msra.mxu0 0.0
    %1549 = vmatprep.subr.mxu0 0.0
    %1550 = vmatpush2.msra.mxu0 0.0
    %1551 = vmatprep.subr.mxu0 0.0
    %1552 = vmatpush2.msra.mxu0 0.0
    %1553 = vmatprep.subr.mxu0 0.0
    %1554 = vmatpush2.msra.mxu0 0.0
    %1555 = vmatprep.subr.mxu0 0.0
    %1556 = vmatpush2.msra.mxu0 0.0
    %1557 = vmatprep.subr.mxu0 0.0
    %1558 = vmatpush2.msra.mxu0 0.0
    %1559 = vmatprep.subr.mxu0 0.0
    %1560 = vmatpush2.msra.mxu0 0.0
    %1561 = vmatprep.subr.mxu0 0.0
    %1562 = vmatpush2.msra.mxu0 0.0
    %1563 = vmatprep.subr.mxu0 0.0
    %1564 = vmatpush2.msra.mxu0 0.0
    %1565 = vmatprep.subr.mxu0 0.0
    %1566 = vmatpush2.msra.mxu0 0.0
    %1567 = vmatprep.subr.mxu0 0.0
    %1568 = vmatpush2.msra.mxu0 0.0
    %1569 = vmatprep.subr.mxu0 0.0
    %1570 = vmatpush2.msra.mxu0 0.0
    %1571 = vmatprep.subr.mxu0 0.0
    %1572 = vmatpush2.msra.mxu0 0.0
    %1573 = vmatprep.mubr.f32.mxu0 0.0
    %1574 = vmatmul.mubr.f32.gmra.mxu0 %v1507
    %v1575 = vpop.f32.mrf.mxu0
    %v1576 = vadd.f32 %v1504, %v1575
    %v1577 = vpop.f32.mrf.mxu0
    %1578 = vdwg.mxu0
    %v1579 = vmax.f32 %v1576, 0.0
    %v1580 = vld [vmem:[%s9] sm:$0xf]
    %v1581 = vld [vmem:[%s10] sm:$0x1]
    %v1583 = vlaneseq
    %v1584 = vshrl.u32 %v1583, 7
    %v1585 = vsub.s32 0, %v1584
    %v1586 = vrot.slane %v1581, %v1585
    %vm1588 = vcmask 31744
    %v1590 = vsel %vm1588, %v1579, 0
    %vm1592 = vcmask 1043456
    %v1594 = vsel %vm1592, %v1580, 0
    %1596 = vmatprep.subr.mxu0 0.0
    %1597 = vmatpush1.msra.mxu0 0.0
    %1598 = vmatprep.subr.mxu0 0.0
    %1599 = vmatpush1.msra.mxu0 0.0
    %1600 = vmatprep.subr.mxu0 0.0
    %1601 = vmatpush1.msra.mxu0 0.0
    %1602 = vmatprep.subr.mxu0 0.0
    %1603 = vmatpush1.msra.mxu0 0.0
    %1604 = vmatprep.subr.mxu0 0.0
    %1605 = vmatpush1.msra.mxu0 0.0
    %1606 = vmatprep.subr.mxu0 0.0
    %1607 = vmatpush1.msra.mxu0 0.0
    %1608 = vmatprep.subr.mxu0 0.0
    %1609 = vmatpush1.msra.mxu0 0.0
    %1610 = vmatprep.subr.mxu0 0.0
    %1611 = vmatpush1.msra.mxu0 0.0
    %1612 = vmatprep.subr.mxu0 0.0
    %1613 = vmatpush1.msra.mxu0 0.0
    %1614 = vmatprep.subr.mxu0 0.0
    %1615 = vmatpush1.msra.mxu0 0.0
    %1616 = vmatprep.subr.mxu0 0.0
    %1617 = vmatpush1.msra.mxu0 0.0
    %1618 = vmatprep.subr.mxu0 0.0
    %1619 = vmatpush1.msra.mxu0 0.0
    %1620 = vmatprep.subr.mxu0 0.0
    %1621 = vmatpush1.msra.mxu0 0.0
    %1622 = vmatprep.subr.mxu0 0.0
    %1623 = vmatpush1.msra.mxu0 0.0
    %1624 = vmatprep.subr.mxu0 0.0
    %1625 = vmatpush1.msra.mxu0 0.0
    %1626 = vmatprep.subr.mxu0 0.0
    %1627 = vmatpush1.msra.mxu0 %v1594
    %1628 = vmatprep.subr.mxu0 0.0
    %1629 = vmatpush2.msra.mxu0 0.0
    %1630 = vmatprep.subr.mxu0 0.0
    %1631 = vmatpush2.msra.mxu0 0.0
    %1632 = vmatprep.subr.mxu0 0.0
    %1633 = vmatpush2.msra.mxu0 0.0
    %1634 = vmatprep.subr.mxu0 0.0
    %1635 = vmatpush2.msra.mxu0 0.0
    %1636 = vmatprep.subr.mxu0 0.0
    %1637 = vmatpush2.msra.mxu0 0.0
    %1638 = vmatprep.subr.mxu0 0.0
    %1639 = vmatpush2.msra.mxu0 0.0
    %1640 = vmatprep.subr.mxu0 0.0
    %1641 = vmatpush2.msra.mxu0 0.0
    %1642 = vmatprep.subr.mxu0 0.0
    %1643 = vmatpush2.msra.mxu0 0.0
    %1644 = vmatprep.subr.mxu0 0.0
    %1645 = vmatpush2.msra.mxu0 0.0
    %1646 = vmatprep.subr.mxu0 0.0
    %1647 = vmatpush2.msra.mxu0 0.0
    %1648 = vmatprep.subr.mxu0 0.0
    %1649 = vmatpush2.msra.mxu0 0.0
    %1650 = vmatprep.subr.mxu0 0.0
    %1651 = vmatpush2.msra.mxu0 0.0
    %1652 = vmatprep.subr.mxu0 0.0
    %1653 = vmatpush2.msra.mxu0 0.0
    %1654 = vmatprep.subr.mxu0 0.0
    %1655 = vmatpush2.msra.mxu0 0.0
    %1656 = vmatprep.subr.mxu0 0.0
    %1657 = vmatpush2.msra.mxu0 0.0
    %1658 = vmatprep.subr.mxu0 0.0
    %1659 = vmatpush2.msra.mxu0 0.0
    %1660 = vmatprep.mubr.f32.mxu0 0.0
    %1661 = vmatmul.mubr.f32.gmra.mxu0 %v1590
    %v1662 = vpop.f32.mrf.mxu0
    %v1663 = vadd.f32 %v1586, %v1662
    %v1664 = vpop.f32.mrf.mxu0
    %1665 = vdwg.mxu0
    %v1666 = vxor.u32 %v1663, 2147483648
    %v1667 = vmul.f32 %v1666, 1.442695
    %v1668 = vpow.pop %v1667
    %v1669 = vadd.f32 %v1668, 1.0
    %v1670 = vrcp.pop %v1669
    %v1671 = vmul.f32 1.0, %v1670
    %v1673 = vsel %vm412, %v1671, 0
    %1675 = vmatprep.subr.mxu0 0.0
    %1676 = vmatpush1.msra.mxu0 0.0
    %1677 = vmatprep.subr.mxu0 0.0
    %1678 = vmatpush1.msra.mxu0 0.0
    %1679 = vmatprep.subr.mxu0 0.0
    %1680 = vmatpush1.msra.mxu0 0.0
    %1681 = vmatprep.subr.mxu0 0.0
    %1682 = vmatpush1.msra.mxu0 0.0
    %1683 = vmatprep.subr.mxu0 0.0
    %1684 = vmatpush1.msra.mxu0 0.0
    %1685 = vmatprep.subr.mxu0 0.0
    %1686 = vmatpush1.msra.mxu0 0.0
    %1687 = vmatprep.subr.mxu0 0.0
    %1688 = vmatpush1.msra.mxu0 0.0
    %1689 = vmatprep.subr.mxu0 0.0
    %1690 = vmatpush1.msra.mxu0 0.0
    %1691 = vmatprep.subr.mxu0 0.0
    %1692 = vmatpush1.msra.mxu0 0.0
    %1693 = vmatprep.subr.mxu0 0.0
    %1694 = vmatpush1.msra.mxu0 0.0
    %1695 = vmatprep.subr.mxu0 0.0
    %1696 = vmatpush1.msra.mxu0 0.0
    %1697 = vmatprep.subr.mxu0 0.0
    %1698 = vmatpush1.msra.mxu0 0.0
    %1699 = vmatprep.subr.mxu0 0.0
    %1700 = vmatpush1.msra.mxu0 0.0
    %1701 = vmatprep.subr.mxu0 0.0
    %1702 = vmatpush1.msra.mxu0 0.0
    %1703 = vmatprep.subr.mxu0 %v1091
    %1704 = vmatpush1.msra.mxu0 %v1090
    %1705 = vmatprep.subr.mxu0 %v1089
    %1706 = vmatpush1.msra.mxu0 %v1088
    %1707 = vmatprep.subr.mxu0 0.0
    %1708 = vmatpush2.msra.mxu0 0.0
    %1709 = vmatprep.subr.mxu0 0.0
    %1710 = vmatpush2.msra.mxu0 0.0
    %1711 = vmatprep.subr.mxu0 0.0
    %1712 = vmatpush2.msra.mxu0 0.0
    %1713 = vmatprep.subr.mxu0 0.0
    %1714 = vmatpush2.msra.mxu0 0.0
    %1715 = vmatprep.subr.mxu0 0.0
    %1716 = vmatpush2.msra.mxu0 0.0
    %1717 = vmatprep.subr.mxu0 0.0
    %1718 = vmatpush2.msra.mxu0 0.0
    %1719 = vmatprep.subr.mxu0 0.0
    %1720 = vmatpush2.msra.mxu0 0.0
    %1721 = vmatprep.subr.mxu0 0.0
    %1722 = vmatpush2.msra.mxu0 0.0
    %1723 = vmatprep.subr.mxu0 0.0
    %1724 = vmatpush2.msra.mxu0 0.0
    %1725 = vmatprep.subr.mxu0 0.0
    %1726 = vmatpush2.msra.mxu0 0.0
    %1727 = vmatprep.subr.mxu0 0.0
    %1728 = vmatpush2.msra.mxu0 0.0
    %1729 = vmatprep.subr.mxu0 0.0
    %1730 = vmatpush2.msra.mxu0 0.0
    %1731 = vmatprep.subr.mxu0 0.0
    %1732 = vmatpush2.msra.mxu0 0.0
    %1733 = vmatprep.subr.mxu0 0.0
    %1734 = vmatpush2.msra.mxu0 0.0
    %1735 = vmatprep.subr.mxu0 0.0
    %1736 = vmatpush2.msra.mxu0 0.0
    %1737 = vmatprep.subr.mxu0 0.0
    %1738 = vmatpush2.msra.mxu0 0.0
    %1739 = vmatprep.mubr.f32.mxu0 0.0
    %1740 = vmatmul.mubr.f32.gmra.mxu0 %v1673
    %v1741 = vpop.f32.mrf.mxu0
    %v1742 = vadd.f32 0.0, %v1741
    %v1743 = vpop.f32.mrf.mxu0
    %v1744 = vadd.f32 0.0, %v1743
    %1745 = vdwg.mxu0
    %v1748 = vcombine.low %v1742, %v1744
    %v1750 = vunpack.c.l.s4 1966171168
    %v1751 = vunpack.c.0.s8 %v1750
    %v1752 = vlaneseq
    %v1753 = vshrl.u32 %v1752, 7
    %v1754 = vsub.s32 %v1751, %v1753
    %v1755 = vrot.slane %v1748, %v1754
    %v1756 = vcombine.high %v1755, %v1755
    %v1758 = vunpack.c.l.s4 1966171168
    %v1759 = vunpack.c.0.s8 %v1758
    %v1760 = vlaneseq
    %v1761 = vshrl.u32 %v1760, 7
    %v1762 = vsub.s32 %v1759, %v1761
    %v1763 = vrot.slane %v1755, %v1762
    %v1765 = vunpack.c.l.s4 1966171168
    %v1766 = vunpack.c.0.s8 %v1765
    %v1767 = vlaneseq
    %v1768 = vshrl.u32 %v1767, 7
    %v1769 = vsub.s32 %v1766, %v1768
    %v1770 = vrot.slane %v1756, %v1769
    %v1771 = vlaneseq
    %v1772 = vshrl.u32 %v1771, 7
    %v1773 = vsub.s32 0, %v1772
    %v1774 = vrot.slane %v1763, %v1773
    %v1775 = vlaneseq
    %v1776 = vshrl.u32 %v1775, 7
    %v1777 = vsub.s32 1, %v1776
    %v1778 = vrot.slane %v1763, %v1777
    %v1779 = vlaneseq
    %v1780 = vshrl.u32 %v1779, 7
    %v1781 = vsub.s32 0, %v1780
    %v1782 = vrot.slane %v1770, %v1781
    %v1783 = vlaneseq
    %v1784 = vshrl.u32 %v1783, 7
    %v1785 = vsub.s32 1, %v1784
    %v1786 = vrot.slane %v1770, %v1785
    %v1791 = vmul.f32 %v1381, %v1774
    %v1792 = vmul.f32 %v1382, %v1778
    %v1793 = vmul.f32 %v1383, %v1774
    %v1794 = vmul.f32 %v1384, %v1778
    %v1795 = vmul.f32 %v1385, %v1782
    %v1796 = vmul.f32 %v1386, %v1786
    %v1797 = vmul.f32 %v1387, %v1782
    %v1798 = vmul.f32 %v1388, %v1786
    %v1799 = vpack.c.bf16 %v1793, %v1791
    %v1800 = vpack.c.bf16 %v1794, %v1792
    %v1801 = vpack.c.bf16 %v1797, %v1795
    %v1802 = vpack.c.bf16 %v1798, %v1796
    %v1803 = vld [vmem:[%s11] sm:$0xf]
    %v1804 = vld [vmem:[%s11 + $0x4] sm:$0xf]
    %v1805 = vld [vmem:[%s11 + $0x8] sm:$0xf]
    %v1806 = vld [vmem:[%s11 + $0xc] sm:$0xf]
    %v1807 = vld [vmem:[%s11 + $0x10] sm:$0xf]
    %v1808 = vld [vmem:[%s11 + $0x14] sm:$0xf]
    %v1809 = vld [vmem:[%s11 + $0x18] sm:$0xf]
    %v1810 = vld [vmem:[%s11 + $0x1c] sm:$0xf]
    %v1811 = vld [vmem:[%s11 + $0x20] sm:$0xf]
    %v1812 = vld [vmem:[%s11 + $0x24] sm:$0xf]
    %v1813 = vld [vmem:[%s11 + $0x28] sm:$0xf]
    %v1814 = vld [vmem:[%s11 + $0x2c] sm:$0xf]
    %v1815 = vld [vmem:[%s11 + $0x30] sm:$0xf]
    %v1816 = vld [vmem:[%s11 + $0x34] sm:$0xf]
    %v1817 = vld [vmem:[%s11 + $0x38] sm:$0xf]
    %v1818 = vld [vmem:[%s11 + $0x3c] sm:$0xf]
    %v1819 = vld [vmem:[%s11 + $0x40] sm:$0xf]
    %v1820 = vld [vmem:[%s11 + $0x44] sm:$0xf]
    %v1821 = vld [vmem:[%s11 + $0x48] sm:$0xf]
    %v1822 = vld [vmem:[%s11 + $0x4c] sm:$0xf]
    %v1823 = vld [vmem:[%s11 + $0x50] sm:$0xf]
    %v1824 = vld [vmem:[%s11 + $0x54] sm:$0xf]
    %v1825 = vld [vmem:[%s11 + $0x58] sm:$0xf]
    %v1826 = vld [vmem:[%s11 + $0x5c] sm:$0xf]
    %v1827 = vld [vmem:[%s11 + $0x60] sm:$0xf]
    %v1828 = vld [vmem:[%s11 + $0x64] sm:$0xf]
    %v1829 = vld [vmem:[%s11 + $0x68] sm:$0xf]
    %v1830 = vld [vmem:[%s11 + $0x6c] sm:$0xf]
    %v1831 = vld [vmem:[%s11 + $0x70] sm:$0xf]
    %v1832 = vld [vmem:[%s11 + $0x74] sm:$0xf]
    %v1833 = vld [vmem:[%s11 + $0x78] sm:$0xf]
    %v1834 = vld [vmem:[%s11 + $0x7c] sm:$0xf]
    %v1867 = vunpack.c.l.b16 %v1803
    %v1868 = vunpack.c.l.b16 %v1804
    %v1869 = vunpack.c.l.b16 %v1805
    %v1870 = vunpack.c.l.b16 %v1806
    %v1871 = vunpack.c.l.b16 %v1807
    %v1872 = vunpack.c.l.b16 %v1808
    %v1873 = vunpack.c.l.b16 %v1809
    %v1874 = vunpack.c.l.b16 %v1810
    %v1875 = vunpack.c.l.b16 %v1811
    %v1876 = vunpack.c.l.b16 %v1812
    %v1877 = vunpack.c.l.b16 %v1813
    %v1878 = vunpack.c.l.b16 %v1814
    %v1879 = vunpack.c.l.b16 %v1815
    %v1880 = vunpack.c.l.b16 %v1816
    %v1881 = vunpack.c.l.b16 %v1817
    %v1882 = vunpack.c.l.b16 %v1818
    %v1883 = vunpack.c.l.b16 %v1819
    %v1884 = vunpack.c.l.b16 %v1820
    %v1885 = vunpack.c.l.b16 %v1821
    %v1886 = vunpack.c.l.b16 %v1822
    %v1887 = vunpack.c.l.b16 %v1823
    %v1888 = vunpack.c.l.b16 %v1824
    %v1889 = vunpack.c.l.b16 %v1825
    %v1890 = vunpack.c.l.b16 %v1826
    %v1891 = vunpack.c.l.b16 %v1827
    %v1892 = vunpack.c.l.b16 %v1828
    %v1893 = vunpack.c.l.b16 %v1829
    %v1894 = vunpack.c.l.b16 %v1830
    %v1895 = vunpack.c.l.b16 %v1831
    %v1896 = vunpack.c.l.b16 %v1832
    %v1897 = vunpack.c.l.b16 %v1833
    %v1898 = vunpack.c.l.b16 %v1834
    %v1899 = vpack.c.b16 %v1868, %v1867
    %v1900 = vpack.c.b16 %v1870, %v1869
    %v1901 = vpack.c.b16 %v1872, %v1871
    %v1902 = vpack.c.b16 %v1874, %v1873
    %v1903 = vpack.c.b16 %v1876, %v1875
    %v1904 = vpack.c.b16 %v1878, %v1877
    %v1905 = vpack.c.b16 %v1880, %v1879
    %v1906 = vpack.c.b16 %v1882, %v1881
    %v1907 = vpack.c.b16 %v1884, %v1883
    %v1908 = vpack.c.b16 %v1886, %v1885
    %v1909 = vpack.c.b16 %v1888, %v1887
    %v1910 = vpack.c.b16 %v1890, %v1889
    %v1911 = vpack.c.b16 %v1892, %v1891
    %v1912 = vpack.c.b16 %v1894, %v1893
    %v1913 = vpack.c.b16 %v1896, %v1895
    %v1914 = vpack.c.b16 %v1898, %v1897
    %1931 = vmatprep.subr.bf16.mxu0 0
    %1932 = vmatpush1.bf16.msra.mxu0 %v1906
    %1933 = vmatprep.subr.bf16.mxu0 0
    %1934 = vmatpush1.bf16.msra.mxu0 %v1905
    %1935 = vmatprep.subr.bf16.mxu0 0
    %1936 = vmatpush1.bf16.msra.mxu0 %v1904
    %1937 = vmatprep.subr.bf16.mxu0 0
    %1938 = vmatpush1.bf16.msra.mxu0 %v1903
    %1939 = vmatprep.subr.bf16.mxu0 0
    %1940 = vmatpush1.bf16.msra.mxu0 %v1902
    %1941 = vmatprep.subr.bf16.mxu0 0
    %1942 = vmatpush1.bf16.msra.mxu0 %v1901
    %1943 = vmatprep.subr.bf16.mxu0 0
    %1944 = vmatpush1.bf16.msra.mxu0 %v1900
    %1945 = vmatprep.subr.bf16.mxu0 0
    %1946 = vmatpush1.bf16.msra.mxu0 %v1899
    %1947 = vmatprep.subr.bf16.mxu0 0
    %1948 = vmatpush2.bf16.msra.mxu0 %v1914
    %1949 = vmatprep.subr.bf16.mxu0 0
    %1950 = vmatpush2.bf16.msra.mxu0 %v1913
    %1951 = vmatprep.subr.bf16.mxu0 0
    %1952 = vmatpush2.bf16.msra.mxu0 %v1912
    %1953 = vmatprep.subr.bf16.mxu0 0
    %1954 = vmatpush2.bf16.msra.mxu0 %v1911
    %1955 = vmatprep.subr.bf16.mxu0 0
    %1956 = vmatpush2.bf16.msra.mxu0 %v1910
    %1957 = vmatprep.subr.bf16.mxu0 0
    %1958 = vmatpush2.bf16.msra.mxu0 %v1909
    %1959 = vmatprep.subr.bf16.mxu0 0
    %1960 = vmatpush2.bf16.msra.mxu0 %v1908
    %1961 = vmatprep.subr.bf16.mxu0 0
    %1962 = vmatpush2.bf16.msra.mxu0 %v1907
    %1963 = vmatprep.mubr.bf16.mxu0 %v1800
    %1964 = vmatmul.mubr.bf16.gmra.mxu0 %v1799
    %v1965 = vpop.f32.mrf.mxu0
    %v1966 = vadd.f32 0.0, %v1965
    %v1967 = vpop.f32.mrf.mxu0
    %v1968 = vpop.f32.mrf.mxu0
    %v1969 = vadd.f32 0.0, %v1968
    %v1970 = vpop.f32.mrf.mxu0
    %1971 = vmatprep.mubr.bf16.mxu0 %v1802
    %1972 = vmatmul.mubr.bf16.gmra.mxu0 %v1801
    %v1973 = vpop.f32.mrf.mxu0
    %v1974 = vadd.f32 0.0, %v1973
    %v1975 = vpop.f32.mrf.mxu0
    %v1976 = vpop.f32.mrf.mxu0
    %v1977 = vadd.f32 0.0, %v1976
    %v1978 = vpop.f32.mrf.mxu0
    %1979 = vdwg.mxu0
    %v1980 = vld [vmem:[%s12] sm:$0x1]
    %v1981 = vld [vmem:[%s13] sm:$0x1]
    %v1982 = vld [vmem:[%s18] sm:$0xff]
    %v1983 = vld [vmem:[%s18 + $0x8] sm:$0xff]
    %v1984 = vld [vmem:[%s18 + $0x10] sm:$0xff]
    %v1985 = vld [vmem:[%s18 + $0x18] sm:$0xff]
    %v1986 = vld [vmem:[%s18 + $0x20] sm:$0xff]
    %v1987 = vld [vmem:[%s18 + $0x28] sm:$0xff]
    %v1988 = vld [vmem:[%s18 + $0x30] sm:$0xff]
    %v1989 = vld [vmem:[%s18 + $0x38] sm:$0xff]
    %v1990 = vld [vmem:[%s18 + $0x40] sm:$0xff]
    %v1991 = vld [vmem:[%s18 + $0x48] sm:$0xff]
    %v1992 = vld [vmem:[%s18 + $0x50] sm:$0xff]
    %v1993 = vld [vmem:[%s18 + $0x58] sm:$0xff]
    %v1994 = vld [vmem:[%s18 + $0x60] sm:$0xff]
    %v1995 = vld [vmem:[%s18 + $0x68] sm:$0xff]
    %v1996 = vld [vmem:[%s18 + $0x70] sm:$0xff]
    %v1997 = vld [vmem:[%s18 + $0x78] sm:$0xff]
    %v1998 = vld [vmem:[%s19] sm:$0xff]
    %v1999 = vadd.f32 %v1966, %v1969
    %v2000 = vadd.f32 %v1999, %v1974
    %v2001 = vadd.f32 %v2000, %v1977
    %v2002 = vrot.slane %v2001, 4
    %v2003 = vadd.f32 %v2001, %v2002
    %v2004 = vrot.slane %v2003, 2
    %v2005 = vadd.f32 %v2003, %v2004
    %v2006 = vrot.slane %v2005, 1
    %v2007 = vadd.f32 %v2005, %v2006
    %v2008 = vmul.f32 %v1966, %v1966
    %v2009 = vmul.f32 %v1969, %v1969
    %v2010 = vmul.f32 %v1974, %v1974
    %v2011 = vmul.f32 %v1977, %v1977
    %v2012 = vadd.f32 %v2008, %v2009
    %v2013 = vadd.f32 %v2012, %v2010
    %v2014 = vadd.f32 %v2013, %v2011
    %v2015 = vrot.slane %v2014, 4
    %v2016 = vadd.f32 %v2014, %v2015
    %v2017 = vrot.slane %v2016, 2
    %v2018 = vadd.f32 %v2016, %v2017
    %v2019 = vrot.slane %v2018, 1
    %v2020 = vadd.f32 %v2018, %v2019
    %v2021 = vsel %vm304, %v2007, %v2020
    %2022 = vmatprep.subr.mxu0 0.0
    %2023 = vmatpush1.msra.mxu0 %v1997
    %2024 = vmatprep.subr.mxu0 0.0
    %2025 = vmatpush1.msra.mxu0 %v1996
    %2026 = vmatprep.subr.mxu0 0.0
    %2027 = vmatpush1.msra.mxu0 %v1995
    %2028 = vmatprep.subr.mxu0 0.0
    %2029 = vmatpush1.msra.mxu0 %v1994
    %2030 = vmatprep.subr.mxu0 0.0
    %2031 = vmatpush1.msra.mxu0 %v1993
    %2032 = vmatprep.subr.mxu0 0.0
    %2033 = vmatpush1.msra.mxu0 %v1992
    %2034 = vmatprep.subr.mxu0 0.0
    %2035 = vmatpush1.msra.mxu0 %v1991
    %2036 = vmatprep.subr.mxu0 0.0
    %2037 = vmatpush1.msra.mxu0 %v1990
    %2038 = vmatprep.subr.mxu0 0.0
    %2039 = vmatpush1.msra.mxu0 %v1989
    %2040 = vmatprep.subr.mxu0 0.0
    %2041 = vmatpush1.msra.mxu0 %v1988
    %2042 = vmatprep.subr.mxu0 0.0
    %2043 = vmatpush1.msra.mxu0 %v1987
    %2044 = vmatprep.subr.mxu0 0.0
    %2045 = vmatpush1.msra.mxu0 %v1986
    %2046 = vmatprep.subr.mxu0 0.0
    %2047 = vmatpush1.msra.mxu0 %v1985
    %2048 = vmatprep.subr.mxu0 0.0
    %2049 = vmatpush1.msra.mxu0 %v1984
    %2050 = vmatprep.subr.mxu0 0.0
    %2051 = vmatpush1.msra.mxu0 %v1983
    %2052 = vmatprep.subr.mxu0 0.0
    %2053 = vmatpush1.msra.mxu0 %v1982
    %2054 = vmatprep.subr.mxu0 0.0
    %2055 = vmatpush2.msra.mxu0 0.0
    %2056 = vmatprep.subr.mxu0 0.0
    %2057 = vmatpush2.msra.mxu0 0.0
    %2058 = vmatprep.subr.mxu0 0.0
    %2059 = vmatpush2.msra.mxu0 0.0
    %2060 = vmatprep.subr.mxu0 0.0
    %2061 = vmatpush2.msra.mxu0 0.0
    %2062 = vmatprep.subr.mxu0 0.0
    %2063 = vmatpush2.msra.mxu0 0.0
    %2064 = vmatprep.subr.mxu0 0.0
    %2065 = vmatpush2.msra.mxu0 0.0
    %2066 = vmatprep.subr.mxu0 0.0
    %2067 = vmatpush2.msra.mxu0 0.0
    %2068 = vmatprep.subr.mxu0 0.0
    %2069 = vmatpush2.msra.mxu0 0.0
    %2070 = vmatprep.subr.mxu0 0.0
    %2071 = vmatpush2.msra.mxu0 0.0
    %2072 = vmatprep.subr.mxu0 0.0
    %2073 = vmatpush2.msra.mxu0 0.0
    %2074 = vmatprep.subr.mxu0 0.0
    %2075 = vmatpush2.msra.mxu0 0.0
    %2076 = vmatprep.subr.mxu0 0.0
    %2077 = vmatpush2.msra.mxu0 0.0
    %2078 = vmatprep.subr.mxu0 0.0
    %2079 = vmatpush2.msra.mxu0 0.0
    %2080 = vmatprep.subr.mxu0 0.0
    %2081 = vmatpush2.msra.mxu0 0.0
    %2082 = vmatprep.subr.mxu0 0.0
    %2083 = vmatpush2.msra.mxu0 0.0
    %2084 = vmatprep.subr.mxu0 0.0
    %2085 = vmatpush2.msra.mxu0 0.0
    %2086 = vmatprep.mubr.f32.mxu0 0.0
    %2087 = vmatmul.mubr.f32.gmra.mxu0 %v2021
    %v2088 = vpop.f32.mrf.mxu0
    %v2089 = vadd.f32 0.0, %v2088
    %v2090 = vpop.f32.mrf.mxu0
    %2091 = vdwg.mxu0
    %v2092 = vmul.f32 %v2089, 0.001953125
    %v2093 = vmul.f32 %v2092, %v2092
    %v2095 = vrot.slane %v2093, 7
    %v2097 = vsub.f32 %v2092, %v2095
    %v2098 = vadd.f32 %v2097, 1e-05
    %v2099 = vrsqrt.pop %v2098
    %v2102 = vunpack.c.l.s4 1966171168
    %v2103 = vunpack.c.0.s8 %v2102
    %v2104 = vlaneseq
    %v2105 = vshrl.u32 %v2104, 7
    %v2106 = vsub.s32 %v2103, %v2105
    %v2107 = vrot.slane %v2099, %v2106
    %v2108 = vcombine.high %v2107, %v2107
    %v2110 = vunpack.c.l.s4 1966171168
    %v2111 = vunpack.c.0.s8 %v2110
    %v2112 = vlaneseq
    %v2113 = vshrl.u32 %v2112, 7
    %v2114 = vsub.s32 %v2111, %v2113
    %v2115 = vrot.slane %v2108, %v2114
    %v2117 = vmul.f32 %v1980, %v2115
    %v2118 = vmul.f32 %v2092, %v2117
    %v2119 = vsub.f32 %v1981, %v2118
    %v2121 = vlaneseq
    %v2122 = vshrl.u32 %v2121, 7
    %v2123 = vsub.s32 0, %v2122
    %v2124 = vrot.slane %v2119, %v2123
    %v2126 = vsel %vm304, %v2117, %v2124
    %vm2127 = vcmask 64512
    %v2129 = vsel %vm2127, %v2126, 0
    %2131 = vmatprep.subr.mxu0 0.0
    %2132 = vmatpush1.msra.mxu0 0.0
    %2133 = vmatprep.subr.mxu0 0.0
    %2134 = vmatpush1.msra.mxu0 0.0
    %2135 = vmatprep.subr.mxu0 0.0
    %2136 = vmatpush1.msra.mxu0 0.0
    %2137 = vmatprep.subr.mxu0 0.0
    %2138 = vmatpush1.msra.mxu0 0.0
    %2139 = vmatprep.subr.mxu0 0.0
    %2140 = vmatpush1.msra.mxu0 0.0
    %2141 = vmatprep.subr.mxu0 0.0
    %2142 = vmatpush1.msra.mxu0 0.0
    %2143 = vmatprep.subr.mxu0 0.0
    %2144 = vmatpush1.msra.mxu0 0.0
    %2145 = vmatprep.subr.mxu0 0.0
    %2146 = vmatpush1.msra.mxu0 0.0
    %2147 = vmatprep.subr.mxu0 0.0
    %2148 = vmatpush1.msra.mxu0 0.0
    %2149 = vmatprep.subr.mxu0 0.0
    %2150 = vmatpush1.msra.mxu0 0.0
    %2151 = vmatprep.subr.mxu0 0.0
    %2152 = vmatpush1.msra.mxu0 0.0
    %2153 = vmatprep.subr.mxu0 0.0
    %2154 = vmatpush1.msra.mxu0 0.0
    %2155 = vmatprep.subr.mxu0 0.0
    %2156 = vmatpush1.msra.mxu0 0.0
    %2157 = vmatprep.subr.mxu0 0.0
    %2158 = vmatpush1.msra.mxu0 0.0
    %2159 = vmatprep.subr.mxu0 0.0
    %2160 = vmatpush1.msra.mxu0 0.0
    %2161 = vmatprep.subr.mxu0 0.0
    %2162 = vmatpush1.msra.mxu0 %v1998
    %2163 = vmatprep.subr.mxu0 0.0
    %2164 = vmatpush2.msra.mxu0 0.0
    %2165 = vmatprep.subr.mxu0 0.0
    %2166 = vmatpush2.msra.mxu0 0.0
    %2167 = vmatprep.subr.mxu0 0.0
    %2168 = vmatpush2.msra.mxu0 0.0
    %2169 = vmatprep.subr.mxu0 0.0
    %2170 = vmatpush2.msra.mxu0 0.0
    %2171 = vmatprep.subr.mxu0 0.0
    %2172 = vmatpush2.msra.mxu0 0.0
    %2173 = vmatprep.subr.mxu0 0.0
    %2174 = vmatpush2.msra.mxu0 0.0
    %2175 = vmatprep.subr.mxu0 0.0
    %2176 = vmatpush2.msra.mxu0 0.0
    %2177 = vmatprep.subr.mxu0 0.0
    %2178 = vmatpush2.msra.mxu0 0.0
    %2179 = vmatprep.subr.mxu0 0.0
    %2180 = vmatpush2.msra.mxu0 0.0
    %2181 = vmatprep.subr.mxu0 0.0
    %2182 = vmatpush2.msra.mxu0 0.0
    %2183 = vmatprep.subr.mxu0 0.0
    %2184 = vmatpush2.msra.mxu0 0.0
    %2185 = vmatprep.subr.mxu0 0.0
    %2186 = vmatpush2.msra.mxu0 0.0
    %2187 = vmatprep.subr.mxu0 0.0
    %2188 = vmatpush2.msra.mxu0 0.0
    %2189 = vmatprep.subr.mxu0 0.0
    %2190 = vmatpush2.msra.mxu0 0.0
    %2191 = vmatprep.subr.mxu0 0.0
    %2192 = vmatpush2.msra.mxu0 0.0
    %2193 = vmatprep.subr.mxu0 0.0
    %2194 = vmatpush2.msra.mxu0 0.0
    %2195 = vmatprep.mubr.f32.mxu0 0.0
    %2196 = vmatmul.mubr.f32.gmra.mxu0 %v2129
    %v2197 = vpop.f32.mrf.mxu0
    %v2198 = vadd.f32 0.0, %v2197
    %v2199 = vpop.f32.mrf.mxu0
    %2200 = vdwg.mxu0
    %v2201 = vlaneseq
    %v2202 = vshrl.u32 %v2201, 7
    %v2203 = vsub.s32 0, %v2202
    %v2204 = vrot.slane %v2198, %v2203
    %v2205 = vmul.f32 %v1966, %v2204
    %v2206 = vmul.f32 %v1969, %v2204
    %v2207 = vmul.f32 %v1974, %v2204
    %v2208 = vmul.f32 %v1977, %v2204
    %v2209 = vlaneseq
    %v2210 = vshrl.u32 %v2209, 7
    %v2211 = vsub.s32 1, %v2210
    %v2212 = vrot.slane %v2198, %v2211
    %v2213 = vadd.f32 %v2205, %v2212
    %v2214 = vadd.f32 %v2206, %v2212
    %v2215 = vadd.f32 %v2207, %v2212
    %v2216 = vadd.f32 %v2208, %v2212
    %v2217 = vadd.f32 %v2213, %v67
    %v2218 = vadd.f32 %v2214, %v68
    %v2219 = vadd.f32 %v2215, %v69
    %v2220 = vadd.f32 %v2216, %v70
    %2221 = vst [vmem:[#allocation2] sm:$0xff] %v2217
    %2222 = vst [vmem:[#allocation2 + $0x8] sm:$0xff] %v2218
    %2223 = vst [vmem:[#allocation2 + $0x10] sm:$0xff] %v2219
    %2224 = vst [vmem:[#allocation2 + $0x18] sm:$0xff] %v2220
    // Predicated region
    $region82: #{tpu_custom_call.1} parent=1 // pred_check
      _
    $region83: #{tpu_custom_call.1} parent=1 // pred_check_branch
      %2226 = sbr.rel (0) target = $region85
    $region84: #{tpu_custom_call.1} parent=1 // pred_region
      %s2228 = ssub.s32 512, 512
      %2229 = vsyncadd [#allocation3], %s2228
      %s2230 = sshll.u32 [#allocation2], 4
      %s2231 = int_to_ptr.vmem [resolvable:$true] %s2230
      %2236 = dma.vmem_to_hbm [thread:$0]  %s2231, 512, %s20, [#allocation3], 128, 128, 8
    $region85: #{tpu_custom_call.1} parent=1 // pred_fallthru
      _
    // Predicated region
    $region86: #{tpu_custom_call.1} parent=1 // pred_check
      _
    $region87: #{tpu_custom_call.1} parent=1 // pred_check_branch
      %2238 = sbr.rel (0) target = $region89
    $region88: #{tpu_custom_call.1} parent=1 // pred_region
      %2239 = dma.done [#allocation3], 512
    $region89: #{tpu_custom_call.1} parent=1 // pred_fallthru
      _
    %2240 = vsyncpa [#allocation3], 1

</llo_original>
